<compile_context>
chip_gen: v7x
topology: tpu7x:2x2x1
jax: 0.10.0
libtpu: 0.0.40
codegen_flags: <defaults>
</compile_context>

<pallas_src>
import functools
import math

import jax
import jax.numpy as jnp
from jax.experimental import pallas as pl
from jax.experimental.pallas import tpu as pltpu

LN_EPS = 1e-5  # torch.nn.LayerNorm default


# ---------------------------------------------------------------------------
# Fused kernel: LayerNorm + QKV projection + multi-head attention for one
# batch element.  All intermediates stay in VMEM / vregs.
# ---------------------------------------------------------------------------
def fused_perceiver_attn_kernel(x_ref, gamma_ref, beta_ref,
                                wq_ref, bq_ref, wk_ref, bk_ref, wv_ref, bv_ref,
                                o_ref, *, num_heads, scale, compute_dtype):
    # ---- LayerNorm (f32, biased variance to match torch) -------------------
    x = x_ref[0]                                              # [S, D] f32
    mean = jnp.mean(x, axis=-1, keepdims=True)
    var = jnp.mean((x - mean) ** 2, axis=-1, keepdims=True)
    xn = (x - mean) * jax.lax.rsqrt(var + LN_EPS)
    xn = xn * gamma_ref[...] + beta_ref[...]                  # [S, D]
    xn_c = xn.astype(compute_dtype)

    # ---- Q/K/V projections (MXU, f32 accumulate) ---------------------------
    q = jnp.dot(xn_c, wq_ref[...], preferred_element_type=jnp.float32) + bq_ref[...]
    k = jnp.dot(xn_c, wk_ref[...], preferred_element_type=jnp.float32) + bk_ref[...]
    v = jnp.dot(xn_c, wv_ref[...], preferred_element_type=jnp.float32) + bv_ref[...]

    # Fold 1/sqrt(head_dim) into Q (S x QK multiply, not S x S).
    q = q * scale

    QK = q.shape[-1]
    V = v.shape[-1]
    dqk = QK // num_heads
    dv = V // num_heads

    q_c = q.astype(compute_dtype)
    k_c = k.astype(compute_dtype)
    v_c = v.astype(compute_dtype)

    # ---- Per-head attention (static unrolled loop; num_heads is static) ----
    ctx_heads = []
    for h in range(num_heads):
        qh = q_c[:, h * dqk:(h + 1) * dqk]                    # [S, dqk]
        kh = k_c[:, h * dqk:(h + 1) * dqk]                    # [S, dqk]
        vh = v_c[:, h * dv:(h + 1) * dv]                      # [S, dv]

        # scores = qh @ kh^T without materializing a transpose of K.
        s = jax.lax.dot_general(qh, kh, (((1,), (1,)), ((), ())),
                                preferred_element_type=jnp.float32)  # [S, S]

        # TODO(synk): attention_mask / head_mask additions skipped (None here).
        m = jnp.max(s, axis=-1, keepdims=True)
        p = jnp.exp(s - m)                                    # unnormalized probs
        l = jnp.sum(p, axis=-1, keepdims=True)                # [S, 1]

        ctx = jnp.dot(p.astype(compute_dtype), vh,
                      preferred_element_type=jnp.float32)     # [S, dv]
        # Normalize after P@V: divide is [S, dv] not [S, S].
        ctx = ctx * pl.reciprocal(l, approx=False)
        ctx_heads.append(ctx)

    # One lane-dense store of the packed context (== permute(0,2,1,3)+reshape).
    o_ref[0] = jnp.concatenate(ctx_heads, axis=-1).astype(o_ref.dtype)


# ---------------------------------------------------------------------------
# Wrapper
# ---------------------------------------------------------------------------
def perceiver_self_attention(hidden_states, params, num_heads,
                             compute_dtype=jnp.float32):
    B, S, D = hidden_states.shape
    wq, bq = params["wq"], params["bq"]     # wq: [D, qk_channels] (pre-transposed)
    wk, bk = params["wk"], params["bk"]
    wv, bv = params["wv"], params["bv"]
    gamma, beta = params["ln_gamma"], params["ln_beta"]

    QK = wq.shape[1]
    V = wv.shape[1]
    dqk = QK // num_heads
    scale = 1.0 / math.sqrt(dqk)

    # Cast weights once in the wrapper (no per-grid-step casts).  Biases and
    # LayerNorm params stay f32 (added to f32 accumulators).
    wq_c = wq.astype(compute_dtype)
    wk_c = wk.astype(compute_dtype)
    wv_c = wv.astype(compute_dtype)

    gamma2 = gamma.reshape(1, D)
    beta2 = beta.reshape(1, D)
    bq2 = bq.reshape(1, QK)
    bk2 = bk.reshape(1, QK)
    bv2 = bv.reshape(1, V)

    full = lambda b: (0, 0)

    out = pl.pallas_call(
        functools.partial(fused_perceiver_attn_kernel,
                          num_heads=num_heads, scale=scale,
                          compute_dtype=compute_dtype),
        out_shape=jax.ShapeDtypeStruct((B, S, V), jnp.float32),
        grid=(B,),
        in_specs=[
            pl.BlockSpec((1, S, D), lambda b: (b, 0, 0)),   # hidden_states
            pl.BlockSpec((1, D), full),                     # ln gamma
            pl.BlockSpec((1, D), full),                     # ln beta
            pl.BlockSpec((D, QK), full),                    # wq
            pl.BlockSpec((1, QK), full),                    # bq
            pl.BlockSpec((D, QK), full),                    # wk
            pl.BlockSpec((1, QK), full),                    # bk
            pl.BlockSpec((D, V), full),                     # wv
            pl.BlockSpec((1, V), full),                     # bv
        ],
        out_specs=pl.BlockSpec((1, S, V), lambda b: (b, 0, 0)),
        compiler_params=pltpu.CompilerParams(
            # B axis is independent -> megacore / multi-TC sharding on v7x.
            dimension_semantics=("parallel",),
            # Safe on all gens (v7x physical VMEM = 64 MiB); above 16/32 MiB
            # scoped defaults so realistic weight slabs fit.
            vmem_limit_bytes=48 * 1024 * 1024,
        ),
    )(hidden_states, gamma2, beta2, wq_c, bq2, wk_c, bk2, wv_c, bv2)
    return out


# ---------------------------------------------------------------------------
# Pure-JAX reference (for sanity check)
# ---------------------------------------------------------------------------
def reference(hidden_states, params, num_heads):
    B, S, D = hidden_states.shape
    mean = jnp.mean(hidden_states, axis=-1, keepdims=True)
    var = jnp.mean((hidden_states - mean) ** 2, axis=-1, keepdims=True)
    xn = (hidden_states - mean) / jnp.sqrt(var + LN_EPS)
    xn = xn * params["ln_gamma"] + params["ln_beta"]
    q = xn @ params["wq"] + params["bq"]
    k = xn @ params["wk"] + params["bk"]
    v = xn @ params["wv"] + params["bv"]
    QK, V = q.shape[-1], v.shape[-1]
    dqk, dv = QK // num_heads, V // num_heads
    qh = q.reshape(B, S, num_heads, dqk).transpose(0, 2, 1, 3)
    kh = k.reshape(B, S, num_heads, dqk).transpose(0, 2, 1, 3)
    vh = v.reshape(B, S, num_heads, dv).transpose(0, 2, 1, 3)
    s = jnp.einsum("bhqd,bhkd->bhqk", qh, kh) / math.sqrt(dqk)
    p = jax.nn.softmax(s, axis=-1)
    ctx = jnp.einsum("bhqk,bhkd->bhqd", p, vh)
    return ctx.transpose(0, 2, 1, 3).reshape(B, S, num_heads * dv)


if __name__ == "__main__":
    # Module config: is_cross_attention=False, qk_channels=None, v_channels=None
    # -> qk_channels = v_channels = q_dim; dropout prob irrelevant (eval).
    B, S, q_dim, num_heads = 2, 8, 32, 4
    qk_channels = q_dim
    v_channels = qk_channels

    key = jax.random.PRNGKey(0)
    ks = jax.random.split(key, 8)
    x = jax.random.normal(ks[0], (B, S, q_dim), dtype=jnp.float32)

    # Deterministic parameter init (Linear weights stored pre-transposed [in, out]).
    lim = 1.0 / math.sqrt(q_dim)
    params = {
        "ln_gamma": jnp.ones((q_dim,), jnp.float32),
        "ln_beta": jnp.zeros((q_dim,), jnp.float32),
        "wq": jax.random.uniform(ks[1], (q_dim, qk_channels), jnp.float32, -lim, lim),
        "bq": jax.random.uniform(ks[2], (qk_channels,), jnp.float32, -lim, lim),
        "wk": jax.random.uniform(ks[3], (q_dim, qk_channels), jnp.float32, -lim, lim),
        "bk": jax.random.uniform(ks[4], (qk_channels,), jnp.float32, -lim, lim),
        "wv": jax.random.uniform(ks[5], (q_dim, v_channels), jnp.float32, -lim, lim),
        "bv": jax.random.uniform(ks[6], (v_channels,), jnp.float32, -lim, lim),
    }

    ref = reference(x, params, num_heads)

    # f32 path (default): bit-faithful to the PyTorch module.
    out = perceiver_self_attention(x, params, num_heads)
    out = jax.block_until_ready(out)
    assert out.shape == (B, S, v_channels)
    assert jnp.allclose(out, ref, atol=1e-4, rtol=1e-4), "f32 mismatch vs reference"

    # bf16 MXU path (perf option): loose tolerance sanity check.
    out_bf16 = perceiver_self_attention(x, params, num_heads,
                                        compute_dtype=jnp.bfloat16)
    out_bf16 = jax.block_until_ready(out_bf16)
    assert jnp.allclose(out_bf16, ref, atol=5e-2, rtol=5e-2), "bf16 mismatch vs reference"

    print("KERNEL_OK")
</pallas_src>

<mosaic_0001>
module attributes {stable_mosaic.version = 11 : i64} {
  func.func @fused_perceiver_attn_kernel(%arg0: i32, %arg1: memref<1x8x32xf32, #tpu.memory_space<vmem>>, %arg2: memref<1x32xf32, #tpu.memory_space<vmem>>, %arg3: memref<1x32xf32, #tpu.memory_space<vmem>>, %arg4: memref<32x32xf32, #tpu.memory_space<vmem>>, %arg5: memref<1x32xf32, #tpu.memory_space<vmem>>, %arg6: memref<32x32xf32, #tpu.memory_space<vmem>>, %arg7: memref<1x32xf32, #tpu.memory_space<vmem>>, %arg8: memref<32x32xf32, #tpu.memory_space<vmem>>, %arg9: memref<1x32xf32, #tpu.memory_space<vmem>>, %arg10: memref<1x8x32xf32, #tpu.memory_space<vmem>>) attributes {dimension_semantics = [#tpu.dimension_semantics<parallel>], iteration_bounds = array<i64: 2>, scalar_prefetch = 0 : i64, scratch_operands = 0 : i64, tpu.core_type = #tpu.core_type<tc>, window_params = [{transform_indices = @transform_0, window_bounds = array<i64: 1, 8, 32>}, {pipeline_mode = #tpu.pipeline_mode<synchronous>, transform_indices = @transform_1, window_bounds = array<i64: 1, 32>}, {pipeline_mode = #tpu.pipeline_mode<synchronous>, transform_indices = @transform_2, window_bounds = array<i64: 1, 32>}, {pipeline_mode = #tpu.pipeline_mode<synchronous>, transform_indices = @transform_3, window_bounds = array<i64: 32, 32>}, {pipeline_mode = #tpu.pipeline_mode<synchronous>, transform_indices = @transform_4, window_bounds = array<i64: 1, 32>}, {pipeline_mode = #tpu.pipeline_mode<synchronous>, transform_indices = @transform_5, window_bounds = array<i64: 32, 32>}, {pipeline_mode = #tpu.pipeline_mode<synchronous>, transform_indices = @transform_6, window_bounds = array<i64: 1, 32>}, {pipeline_mode = #tpu.pipeline_mode<synchronous>, transform_indices = @transform_7, window_bounds = array<i64: 32, 32>}, {pipeline_mode = #tpu.pipeline_mode<synchronous>, transform_indices = @transform_8, window_bounds = array<i64: 1, 32>}, {transform_indices = @transform_9, window_bounds = array<i64: 1, 8, 32>}]} {
    %c0 = arith.constant 0 : index
    %c0_0 = arith.constant 0 : index
    %c0_1 = arith.constant 0 : index
    %0 = vector.load %arg1[%c0, %c0_0, %c0_1] : memref<1x8x32xf32, #tpu.memory_space<vmem>>, vector<1x8x32xf32>
    %1 = vector.shape_cast %0 : vector<1x8x32xf32> to vector<8x32xf32>
    %cst = arith.constant dense<0.000000e+00> : vector<8xf32>
    %2 = vector.multi_reduction <add>, %1, %cst [1] : vector<8x32xf32> to vector<8xf32>
    %3 = vector.shape_cast %2 : vector<8xf32> to vector<8x1xf32>
    %cst_2 = arith.constant 3.200000e+01 : f32
    %4 = vector.broadcast %cst_2 : f32 to vector<8x1xf32>
    %5 = arith.divf %3, %4 : vector<8x1xf32>
    %6 = vector.broadcast %5 : vector<8x1xf32> to vector<8x32xf32>
    %7 = arith.subf %1, %6 : vector<8x32xf32>
    %8 = arith.mulf %7, %7 : vector<8x32xf32>
    %cst_3 = arith.constant dense<0.000000e+00> : vector<8xf32>
    %9 = vector.multi_reduction <add>, %8, %cst_3 [1] : vector<8x32xf32> to vector<8xf32>
    %10 = vector.shape_cast %9 : vector<8xf32> to vector<8x1xf32>
    %cst_4 = arith.constant 3.200000e+01 : f32
    %11 = vector.broadcast %cst_4 : f32 to vector<8x1xf32>
    %12 = arith.divf %10, %11 : vector<8x1xf32>
    %13 = vector.broadcast %5 : vector<8x1xf32> to vector<8x32xf32>
    %14 = arith.subf %1, %13 : vector<8x32xf32>
    %cst_5 = arith.constant 9.99999974E-6 : f32
    %15 = vector.broadcast %cst_5 : f32 to vector<8x1xf32>
    %16 = arith.addf %12, %15 : vector<8x1xf32>
    %17 = math.rsqrt %16 : vector<8x1xf32>
    %18 = vector.broadcast %17 : vector<8x1xf32> to vector<8x32xf32>
    %19 = arith.mulf %14, %18 : vector<8x32xf32>
    %c0_6 = arith.constant 0 : index
    %c0_7 = arith.constant 0 : index
    %20 = vector.load %arg2[%c0_6, %c0_7] : memref<1x32xf32, #tpu.memory_space<vmem>>, vector<1x32xf32>
    %21 = vector.broadcast %20 : vector<1x32xf32> to vector<8x32xf32>
    %22 = arith.mulf %19, %21 : vector<8x32xf32>
    %c0_8 = arith.constant 0 : index
    %c0_9 = arith.constant 0 : index
    %23 = vector.load %arg3[%c0_8, %c0_9] : memref<1x32xf32, #tpu.memory_space<vmem>>, vector<1x32xf32>
    %24 = vector.broadcast %23 : vector<1x32xf32> to vector<8x32xf32>
    %25 = arith.addf %22, %24 : vector<8x32xf32>
    %c0_10 = arith.constant 0 : index
    %c0_11 = arith.constant 0 : index
    %26 = vector.load %arg4[%c0_10, %c0_11] : memref<32x32xf32, #tpu.memory_space<vmem>>, vector<32x32xf32>
    %cst_12 = arith.constant dense<0.000000e+00> : vector<8x32xf32>
    %27 = tpu.matmul %25, %26, %cst_12 {dimension_numbers = #tpu.dot_dimension_numbers<[1], [0], [0], [1], [0, 0, 1, 1], [], []>} : vector<8x32xf32>, vector<32x32xf32>, vector<8x32xf32> -> vector<8x32xf32>
    %c0_13 = arith.constant 0 : index
    %c0_14 = arith.constant 0 : index
    %28 = vector.load %arg5[%c0_13, %c0_14] : memref<1x32xf32, #tpu.memory_space<vmem>>, vector<1x32xf32>
    %29 = vector.broadcast %28 : vector<1x32xf32> to vector<8x32xf32>
    %30 = arith.addf %27, %29 : vector<8x32xf32>
    %c0_15 = arith.constant 0 : index
    %c0_16 = arith.constant 0 : index
    %31 = vector.load %arg6[%c0_15, %c0_16] : memref<32x32xf32, #tpu.memory_space<vmem>>, vector<32x32xf32>
    %cst_17 = arith.constant dense<0.000000e+00> : vector<8x32xf32>
    %32 = tpu.matmul %25, %31, %cst_17 {dimension_numbers = #tpu.dot_dimension_numbers<[1], [0], [0], [1], [0, 0, 1, 1], [], []>} : vector<8x32xf32>, vector<32x32xf32>, vector<8x32xf32> -> vector<8x32xf32>
    %c0_18 = arith.constant 0 : index
    %c0_19 = arith.constant 0 : index
    %33 = vector.load %arg7[%c0_18, %c0_19] : memref<1x32xf32, #tpu.memory_space<vmem>>, vector<1x32xf32>
    %34 = vector.broadcast %33 : vector<1x32xf32> to vector<8x32xf32>
    %35 = arith.addf %32, %34 : vector<8x32xf32>
    %c0_20 = arith.constant 0 : index
    %c0_21 = arith.constant 0 : index
    %36 = vector.load %arg8[%c0_20, %c0_21] : memref<32x32xf32, #tpu.memory_space<vmem>>, vector<32x32xf32>
    %cst_22 = arith.constant dense<0.000000e+00> : vector<8x32xf32>
    %37 = tpu.matmul %25, %36, %cst_22 {dimension_numbers = #tpu.dot_dimension_numbers<[1], [0], [0], [1], [0, 0, 1, 1], [], []>} : vector<8x32xf32>, vector<32x32xf32>, vector<8x32xf32> -> vector<8x32xf32>
    %c0_23 = arith.constant 0 : index
    %c0_24 = arith.constant 0 : index
    %38 = vector.load %arg9[%c0_23, %c0_24] : memref<1x32xf32, #tpu.memory_space<vmem>>, vector<1x32xf32>
    %39 = vector.broadcast %38 : vector<1x32xf32> to vector<8x32xf32>
    %40 = arith.addf %37, %39 : vector<8x32xf32>
    %cst_25 = arith.constant 0.353553385 : f32
    %41 = vector.broadcast %cst_25 : f32 to vector<8x32xf32>
    %42 = arith.mulf %30, %41 : vector<8x32xf32>
    %43 = vector.extract_strided_slice %42 {offsets = [0, 0], sizes = [8, 8], strides = [1, 1]} : vector<8x32xf32> to vector<8x8xf32>
    %44 = vector.extract_strided_slice %35 {offsets = [0, 0], sizes = [8, 8], strides = [1, 1]} : vector<8x32xf32> to vector<8x8xf32>
    %45 = vector.extract_strided_slice %40 {offsets = [0, 0], sizes = [8, 8], strides = [1, 1]} : vector<8x32xf32> to vector<8x8xf32>
    %cst_26 = arith.constant dense<0.000000e+00> : vector<8x8xf32>
    %46 = tpu.matmul %43, %44, %cst_26 {dimension_numbers = #tpu.dot_dimension_numbers<[1], [1], [0], [0], [0, 0, 1, 0], [], []>} : vector<8x8xf32>, vector<8x8xf32>, vector<8x8xf32> -> vector<8x8xf32>
    %cst_27 = arith.constant dense<0xFF800000> : vector<8xf32>
    %47 = vector.multi_reduction <maximumf>, %46, %cst_27 [1] : vector<8x8xf32> to vector<8xf32>
    %48 = vector.shape_cast %47 : vector<8xf32> to vector<8x1xf32>
    %49 = vector.broadcast %48 : vector<8x1xf32> to vector<8x8xf32>
    %50 = arith.subf %46, %49 : vector<8x8xf32>
    %51 = math.exp %50 : vector<8x8xf32>
    %cst_28 = arith.constant dense<0.000000e+00> : vector<8xf32>
    %52 = vector.multi_reduction <add>, %51, %cst_28 [1] : vector<8x8xf32> to vector<8xf32>
    %53 = vector.shape_cast %52 : vector<8xf32> to vector<8x1xf32>
    %cst_29 = arith.constant dense<0.000000e+00> : vector<8x8xf32>
    %54 = tpu.matmul %51, %45, %cst_29 {dimension_numbers = #tpu.dot_dimension_numbers<[1], [0], [0], [1], [0, 0, 1, 1], [], []>} : vector<8x8xf32>, vector<8x8xf32>, vector<8x8xf32> -> vector<8x8xf32>
    %55 = tpu.reciprocal %53 : vector<8x1xf32> -> vector<8x1xf32>
    %56 = vector.broadcast %55 : vector<8x1xf32> to vector<8x8xf32>
    %57 = arith.mulf %54, %56 : vector<8x8xf32>
    %58 = vector.extract_strided_slice %42 {offsets = [0, 8], sizes = [8, 8], strides = [1, 1]} : vector<8x32xf32> to vector<8x8xf32>
    %59 = vector.extract_strided_slice %35 {offsets = [0, 8], sizes = [8, 8], strides = [1, 1]} : vector<8x32xf32> to vector<8x8xf32>
    %60 = vector.extract_strided_slice %40 {offsets = [0, 8], sizes = [8, 8], strides = [1, 1]} : vector<8x32xf32> to vector<8x8xf32>
    %cst_30 = arith.constant dense<0.000000e+00> : vector<8x8xf32>
    %61 = tpu.matmul %58, %59, %cst_30 {dimension_numbers = #tpu.dot_dimension_numbers<[1], [1], [0], [0], [0, 0, 1, 0], [], []>} : vector<8x8xf32>, vector<8x8xf32>, vector<8x8xf32> -> vector<8x8xf32>
    %cst_31 = arith.constant dense<0xFF800000> : vector<8xf32>
    %62 = vector.multi_reduction <maximumf>, %61, %cst_31 [1] : vector<8x8xf32> to vector<8xf32>
    %63 = vector.shape_cast %62 : vector<8xf32> to vector<8x1xf32>
    %64 = vector.broadcast %63 : vector<8x1xf32> to vector<8x8xf32>
    %65 = arith.subf %61, %64 : vector<8x8xf32>
    %66 = math.exp %65 : vector<8x8xf32>
    %cst_32 = arith.constant dense<0.000000e+00> : vector<8xf32>
    %67 = vector.multi_reduction <add>, %66, %cst_32 [1] : vector<8x8xf32> to vector<8xf32>
    %68 = vector.shape_cast %67 : vector<8xf32> to vector<8x1xf32>
    %cst_33 = arith.constant dense<0.000000e+00> : vector<8x8xf32>
    %69 = tpu.matmul %66, %60, %cst_33 {dimension_numbers = #tpu.dot_dimension_numbers<[1], [0], [0], [1], [0, 0, 1, 1], [], []>} : vector<8x8xf32>, vector<8x8xf32>, vector<8x8xf32> -> vector<8x8xf32>
    %70 = tpu.reciprocal %68 : vector<8x1xf32> -> vector<8x1xf32>
    %71 = vector.broadcast %70 : vector<8x1xf32> to vector<8x8xf32>
    %72 = arith.mulf %69, %71 : vector<8x8xf32>
    %73 = vector.extract_strided_slice %42 {offsets = [0, 16], sizes = [8, 8], strides = [1, 1]} : vector<8x32xf32> to vector<8x8xf32>
    %74 = vector.extract_strided_slice %35 {offsets = [0, 16], sizes = [8, 8], strides = [1, 1]} : vector<8x32xf32> to vector<8x8xf32>
    %75 = vector.extract_strided_slice %40 {offsets = [0, 16], sizes = [8, 8], strides = [1, 1]} : vector<8x32xf32> to vector<8x8xf32>
    %cst_34 = arith.constant dense<0.000000e+00> : vector<8x8xf32>
    %76 = tpu.matmul %73, %74, %cst_34 {dimension_numbers = #tpu.dot_dimension_numbers<[1], [1], [0], [0], [0, 0, 1, 0], [], []>} : vector<8x8xf32>, vector<8x8xf32>, vector<8x8xf32> -> vector<8x8xf32>
    %cst_35 = arith.constant dense<0xFF800000> : vector<8xf32>
    %77 = vector.multi_reduction <maximumf>, %76, %cst_35 [1] : vector<8x8xf32> to vector<8xf32>
    %78 = vector.shape_cast %77 : vector<8xf32> to vector<8x1xf32>
    %79 = vector.broadcast %78 : vector<8x1xf32> to vector<8x8xf32>
    %80 = arith.subf %76, %79 : vector<8x8xf32>
    %81 = math.exp %80 : vector<8x8xf32>
    %cst_36 = arith.constant dense<0.000000e+00> : vector<8xf32>
    %82 = vector.multi_reduction <add>, %81, %cst_36 [1] : vector<8x8xf32> to vector<8xf32>
    %83 = vector.shape_cast %82 : vector<8xf32> to vector<8x1xf32>
    %cst_37 = arith.constant dense<0.000000e+00> : vector<8x8xf32>
    %84 = tpu.matmul %81, %75, %cst_37 {dimension_numbers = #tpu.dot_dimension_numbers<[1], [0], [0], [1], [0, 0, 1, 1], [], []>} : vector<8x8xf32>, vector<8x8xf32>, vector<8x8xf32> -> vector<8x8xf32>
    %85 = tpu.reciprocal %83 : vector<8x1xf32> -> vector<8x1xf32>
    %86 = vector.broadcast %85 : vector<8x1xf32> to vector<8x8xf32>
    %87 = arith.mulf %84, %86 : vector<8x8xf32>
    %88 = vector.extract_strided_slice %42 {offsets = [0, 24], sizes = [8, 8], strides = [1, 1]} : vector<8x32xf32> to vector<8x8xf32>
    %89 = vector.extract_strided_slice %35 {offsets = [0, 24], sizes = [8, 8], strides = [1, 1]} : vector<8x32xf32> to vector<8x8xf32>
    %90 = vector.extract_strided_slice %40 {offsets = [0, 24], sizes = [8, 8], strides = [1, 1]} : vector<8x32xf32> to vector<8x8xf32>
    %cst_38 = arith.constant dense<0.000000e+00> : vector<8x8xf32>
    %91 = tpu.matmul %88, %89, %cst_38 {dimension_numbers = #tpu.dot_dimension_numbers<[1], [1], [0], [0], [0, 0, 1, 0], [], []>} : vector<8x8xf32>, vector<8x8xf32>, vector<8x8xf32> -> vector<8x8xf32>
    %cst_39 = arith.constant dense<0xFF800000> : vector<8xf32>
    %92 = vector.multi_reduction <maximumf>, %91, %cst_39 [1] : vector<8x8xf32> to vector<8xf32>
    %93 = vector.shape_cast %92 : vector<8xf32> to vector<8x1xf32>
    %94 = vector.broadcast %93 : vector<8x1xf32> to vector<8x8xf32>
    %95 = arith.subf %91, %94 : vector<8x8xf32>
    %96 = math.exp %95 : vector<8x8xf32>
    %cst_40 = arith.constant dense<0.000000e+00> : vector<8xf32>
    %97 = vector.multi_reduction <add>, %96, %cst_40 [1] : vector<8x8xf32> to vector<8xf32>
    %98 = vector.shape_cast %97 : vector<8xf32> to vector<8x1xf32>
    %cst_41 = arith.constant dense<0.000000e+00> : vector<8x8xf32>
    %99 = tpu.matmul %96, %90, %cst_41 {dimension_numbers = #tpu.dot_dimension_numbers<[1], [0], [0], [1], [0, 0, 1, 1], [], []>} : vector<8x8xf32>, vector<8x8xf32>, vector<8x8xf32> -> vector<8x8xf32>
    %100 = tpu.reciprocal %98 : vector<8x1xf32> -> vector<8x1xf32>
    %101 = vector.broadcast %100 : vector<8x1xf32> to vector<8x8xf32>
    %102 = arith.mulf %99, %101 : vector<8x8xf32>
    %103 = tpu.concatenate %57, %72, %87, %102 in 1 : vector<8x8xf32>, vector<8x8xf32>, vector<8x8xf32>, vector<8x8xf32> -> vector<8x32xf32>
    %c0_42 = arith.constant 0 : index
    %c0_43 = arith.constant 0 : index
    %c0_44 = arith.constant 0 : index
    %104 = vector.load %arg10[%c0_42, %c0_43, %c0_44] : memref<1x8x32xf32, #tpu.memory_space<vmem>>, vector<1x8x32xf32>
    %105 = vector.shape_cast %104 : vector<1x8x32xf32> to vector<8x32xf32>
    %106 = vector.shape_cast %103 : vector<8x32xf32> to vector<1x8x32xf32>
    tpu.vector_store %arg10[%c0_42, %c0_43, %c0_44], %106 {strides = array<i32>} : memref<1x8x32xf32, #tpu.memory_space<vmem>>, vector<1x8x32xf32>,
    return
  }
  func.func @transform_0(%arg0: i32) -> (i32, i32, i32) {
    %c0_i32 = arith.constant 0 : i32
    %c0_i32_0 = arith.constant 0 : i32
    %c0_i32_1 = arith.constant 0 : i32
    return %arg0, %c0_i32, %c0_i32_0 : i32, i32, i32
  }
  func.func @transform_1(%arg0: i32) -> (i32, i32) {
    %c0_i32 = arith.constant 0 : i32
    %c0_i32_0 = arith.constant 0 : i32
    %c0_i32_1 = arith.constant 0 : i32
    return %c0_i32, %c0_i32_0 : i32, i32
  }
  func.func @transform_2(%arg0: i32) -> (i32, i32) {
    %c0_i32 = arith.constant 0 : i32
    %c0_i32_0 = arith.constant 0 : i32
    %c0_i32_1 = arith.constant 0 : i32
    return %c0_i32, %c0_i32_0 : i32, i32
  }
  func.func @transform_3(%arg0: i32) -> (i32, i32) {
    %c0_i32 = arith.constant 0 : i32
    %c0_i32_0 = arith.constant 0 : i32
    %c0_i32_1 = arith.constant 0 : i32
    return %c0_i32, %c0_i32_0 : i32, i32
  }
  func.func @transform_4(%arg0: i32) -> (i32, i32) {
    %c0_i32 = arith.constant 0 : i32
    %c0_i32_0 = arith.constant 0 : i32
    %c0_i32_1 = arith.constant 0 : i32
    return %c0_i32, %c0_i32_0 : i32, i32
  }
  func.func @transform_5(%arg0: i32) -> (i32, i32) {
    %c0_i32 = arith.constant 0 : i32
    %c0_i32_0 = arith.constant 0 : i32
    %c0_i32_1 = arith.constant 0 : i32
    return %c0_i32, %c0_i32_0 : i32, i32
  }
  func.func @transform_6(%arg0: i32) -> (i32, i32) {
    %c0_i32 = arith.constant 0 : i32
    %c0_i32_0 = arith.constant 0 : i32
    %c0_i32_1 = arith.constant 0 : i32
    return %c0_i32, %c0_i32_0 : i32, i32
  }
  func.func @transform_7(%arg0: i32) -> (i32, i32) {
    %c0_i32 = arith.constant 0 : i32
    %c0_i32_0 = arith.constant 0 : i32
    %c0_i32_1 = arith.constant 0 : i32
    return %c0_i32, %c0_i32_0 : i32, i32
  }
  func.func @transform_8(%arg0: i32) -> (i32, i32) {
    %c0_i32 = arith.constant 0 : i32
    %c0_i32_0 = arith.constant 0 : i32
    %c0_i32_1 = arith.constant 0 : i32
    return %c0_i32, %c0_i32_0 : i32, i32
  }
  func.func @transform_9(%arg0: i32) -> (i32, i32, i32) {
    %c0_i32 = arith.constant 0 : i32
    %c0_i32_0 = arith.constant 0 : i32
    %c0_i32_1 = arith.constant 0 : i32
    return %arg0, %c0_i32, %c0_i32_0 : i32, i32, i32
  }
}

</mosaic_0001>

<llo_original>
// kernel: tpu_custom_call.1
$region0: #{tpu_custom_call.1}
  #allocation0 [shape = 'u32[]', space=smem, size = 0x4, offset = 0x4, fixed_abs, tag = 'smem constant byte address 0x4 - core index']
  #allocation1 [shape = 'u32[144,128]{1,0:T(1,128)}', space=vmem, size = 0x12000, scoped, tag = 'internal scratch']
  %s0 = inlined_call_operand.hbm [shape: f32[2,8,32], index: 0, kind: input, shape index: {}]
  %s1 = inlined_call_operand.vmem [shape: f32[1,32], index: 1, kind: input, shape index: {}]
  %s2 = inlined_call_operand.vmem [shape: f32[1,32], index: 2, kind: input, shape index: {}]
  %s3 = inlined_call_operand.hbm [shape: f32[32,32], index: 3, kind: input, shape index: {}]
  %s4 = inlined_call_operand.vmem [shape: f32[1,32], index: 4, kind: input, shape index: {}]
  %s5 = inlined_call_operand.hbm [shape: f32[32,32], index: 5, kind: input, shape index: {}]
  %s6 = inlined_call_operand.vmem [shape: f32[1,32], index: 6, kind: input, shape index: {}]
  %s7 = inlined_call_operand.hbm [shape: f32[32,32], index: 7, kind: input, shape index: {}]
  %s8 = inlined_call_operand.vmem [shape: f32[1,32], index: 8, kind: input, shape index: {}]
  %s9 = inlined_call_operand.hbm [shape: f32[2,8,32], index: 9, kind: output, shape index: {}]
  %s10 = sld [smem:[#allocation0]]
  $region85: #{tpu_custom_call.1} parent=0
    _
  %s12 = ssub.s32 1, %s10
  %s13 = scalar_select 0, %s12, %s10
  $region1: #{tpu_custom_call.1} parent=0
    #allocation2 [shape = 'u8[8192]{0}', space=vmem, size = 0x2000, scoped, tag = 'input window, operand 0']
    #allocation3 [shape = 's32[2]{0}', space=sflag, size = 0x8, scoped, tag = 'scoped memory for tpu_custom_call.1']
    #allocation4 [shape = 's32[2]{0}', space=sflag, size = 0x8, scoped, tag = 'scoped memory for tpu_custom_call.1']
    #allocation5 [shape = 'u8[16384]{0}', space=vmem, size = 0x4000, scoped, tag = 'input window, operand 3, single buffered']
    #allocation6 [shape = 's32[1]{0}', space=sflag, size = 0x4, scoped, tag = 'scoped memory for tpu_custom_call.1']
    #allocation7 [shape = 'u8[16384]{0}', space=vmem, size = 0x4000, scoped, tag = 'input window, operand 5, single buffered']
    #allocation8 [shape = 'u8[16384]{0}', space=vmem, size = 0x4000, scoped, tag = 'input window, operand 7, single buffered']
    #allocation9 [shape = 's32[1]{0}', space=sflag, size = 0x4, scoped, tag = 'scoped memory for tpu_custom_call.1']
    #allocation10 [shape = 'u8[8192]{0}', space=vmem, size = 0x2000, scoped, tag = 'output window, operand 0']
    %14 = vsyncpa [#allocation3], 0
    %s15 = scalar_lea.sflag [#allocation3], 1
    %16 = vsyncpa %s15, 0
    %17 = vsyncpa [#allocation6], 0
    %18 = vsyncpa [#allocation9], 0
    %19 = vsyncpa [#allocation4], 0
    %s20 = scalar_lea.sflag [#allocation4], 1
    %21 = vsyncpa %s20, 0
    loop: start=0, step=1, limit=4
    $region2: #{tpu_custom_call.1} parent=1 // loop_pre_header
      _
    $region3: #{tpu_custom_call.1} parent=1 // loop_header
      %s23 = sphi 0, %s27
      %p24 = scmp.ge.s32.totalorder %s23, 4
      %s33 = sphi 0, %s35
      %s36 = sphi 0, %s33
      %s37 = sphi 0, %s36
      %s53 = sphi 0, %s37
      %s57 = sphi 0, %s57
      %s59 = sphi 0, %s57
      %s60 = sphi 0, %s59
      %s74 = sphi 0, %s60
      %s78 = sphi 0, %s78
      %s80 = sphi 0, %s78
      %s81 = sphi 0, %s80
      %s95 = sphi 0, %s81
      %s99 = sphi 0, %s99
      %s101 = sphi 0, %s99
      %s102 = sphi 0, %s101
      %s116 = sphi 0, %s102
      %s120 = sphi 0, %s120
      %s122 = sphi 0, %s120
      %s123 = sphi 0, %s122
      %s137 = sphi 0, %s123
      %s141 = sphi 0, %s141
      %s143 = sphi 0, %s141
      %s144 = sphi 0, %s143
      %s158 = sphi 0, %s144
      %s162 = sphi 0, %s162
      %s164 = sphi 0, %s162
      %s165 = sphi 0, %s164
      %s179 = sphi 0, %s165
      %s183 = sphi 0, %s183
      %s185 = sphi 0, %s183
      %s186 = sphi 0, %s185
      %s200 = sphi 0, %s186
      %s204 = sphi 0, %s204
      %s206 = sphi 0, %s204
      %s207 = sphi 0, %s206
      %s221 = sphi 0, %s207
      %s227 = sphi 0, %s229
      %s230 = sphi 0, %s227
      %s231 = sphi 0, %s230
      %s247 = sphi 0, %s231
    $region4: #{tpu_custom_call.1} parent=1 // loop_header_branch
      %26 = sbr.rel (%p24) target = $region8
    $region5: #{tpu_custom_call.1} parent=1 // loop_body
      %s28 = ssub.s32 %s23, 1
      %s29 = ssub.s32 %s23, 2
      %s30 = sadd.s32 %s23, 1
      %s31 = ssub.s32 %s23, %s30
      %p32 = scmp.eq.s32.totalorder %s31, 0
      %s34 = sadd.s32 %s33, 1
      %s35 = scalar_select %p32, %s33, %s34
      %p38 = pneg %p32
      %p39 = scmp.eq.s32.totalorder %s23, 1
      %p40 = por %p38, %p39
      %p41 = scmp.ne.s32.totalorder %s33, %s36
      %p42 = scmp.eq.s32.totalorder %s23, 0
      %p43 = por %p41, %p42
      %p44 = scmp.ne.s32.totalorder %s33, %s36
      %p45 = scmp.eq.s32.totalorder %s28, 1
      %p46 = por %p44, %p45
      %p47 = scmp.ne.s32.totalorder %s36, %s37
      %p48 = scmp.eq.s32.totalorder %s28, 0
      %p49 = por %p47, %p48
      %p50 = scmp.ne.s32.totalorder %s36, %s37
      %p51 = scmp.eq.s32.totalorder %s29, 1
      %p52 = por %p50, %p51
      %p54 = scmp.ne.s32.totalorder %s37, %s53
      %p55 = scmp.eq.s32.totalorder %s29, 0
      %p56 = por %p54, %p55
      %s58 = sadd.s32 %s57, 1
      %p61 = scmp.eq.s32.totalorder %s23, 1
      %p62 = scmp.ne.s32.totalorder %s57, %s59
      %p63 = scmp.eq.s32.totalorder %s23, 0
      %p64 = por %p62, %p63
      %p65 = scmp.ne.s32.totalorder %s57, %s59
      %p66 = scmp.eq.s32.totalorder %s28, 1
      %p67 = por %p65, %p66
      %p68 = scmp.ne.s32.totalorder %s59, %s60
      %p69 = scmp.eq.s32.totalorder %s28, 0
      %p70 = por %p68, %p69
      %p71 = scmp.ne.s32.totalorder %s59, %s60
      %p72 = scmp.eq.s32.totalorder %s29, 1
      %p73 = por %p71, %p72
      %p75 = scmp.ne.s32.totalorder %s60, %s74
      %p76 = scmp.eq.s32.totalorder %s29, 0
      %p77 = por %p75, %p76
      %s79 = sadd.s32 %s78, 1
      %p82 = scmp.eq.s32.totalorder %s23, 1
      %p83 = scmp.ne.s32.totalorder %s78, %s80
      %p84 = scmp.eq.s32.totalorder %s23, 0
      %p85 = por %p83, %p84
      %p86 = scmp.ne.s32.totalorder %s78, %s80
      %p87 = scmp.eq.s32.totalorder %s28, 1
      %p88 = por %p86, %p87
      %p89 = scmp.ne.s32.totalorder %s80, %s81
      %p90 = scmp.eq.s32.totalorder %s28, 0
      %p91 = por %p89, %p90
      %p92 = scmp.ne.s32.totalorder %s80, %s81
      %p93 = scmp.eq.s32.totalorder %s29, 1
      %p94 = por %p92, %p93
      %p96 = scmp.ne.s32.totalorder %s81, %s95
      %p97 = scmp.eq.s32.totalorder %s29, 0
      %p98 = por %p96, %p97
      %s100 = sadd.s32 %s99, 1
      %p103 = scmp.eq.s32.totalorder %s23, 1
      %p104 = scmp.ne.s32.totalorder %s99, %s101
      %p105 = scmp.eq.s32.totalorder %s23, 0
      %p106 = por %p104, %p105
      %p107 = scmp.ne.s32.totalorder %s99, %s101
      %p108 = scmp.eq.s32.totalorder %s28, 1
      %p109 = por %p107, %p108
      %p110 = scmp.ne.s32.totalorder %s101, %s102
      %p111 = scmp.eq.s32.totalorder %s28, 0
      %p112 = por %p110, %p111
      %p113 = scmp.ne.s32.totalorder %s101, %s102
      %p114 = scmp.eq.s32.totalorder %s29, 1
      %p115 = por %p113, %p114
      %p117 = scmp.ne.s32.totalorder %s102, %s116
      %p118 = scmp.eq.s32.totalorder %s29, 0
      %p119 = por %p117, %p118
      %s121 = sadd.s32 %s120, 1
      %p124 = scmp.eq.s32.totalorder %s23, 1
      %p125 = scmp.ne.s32.totalorder %s120, %s122
      %p126 = scmp.eq.s32.totalorder %s23, 0
      %p127 = por %p125, %p126
      %p128 = scmp.ne.s32.totalorder %s120, %s122
      %p129 = scmp.eq.s32.totalorder %s28, 1
      %p130 = por %p128, %p129
      %p131 = scmp.ne.s32.totalorder %s122, %s123
      %p132 = scmp.eq.s32.totalorder %s28, 0
      %p133 = por %p131, %p132
      %p134 = scmp.ne.s32.totalorder %s122, %s123
      %p135 = scmp.eq.s32.totalorder %s29, 1
      %p136 = por %p134, %p135
      %p138 = scmp.ne.s32.totalorder %s123, %s137
      %p139 = scmp.eq.s32.totalorder %s29, 0
      %p140 = por %p138, %p139
      %s142 = sadd.s32 %s141, 1
      %p145 = scmp.eq.s32.totalorder %s23, 1
      %p146 = scmp.ne.s32.totalorder %s141, %s143
      %p147 = scmp.eq.s32.totalorder %s23, 0
      %p148 = por %p146, %p147
      %p149 = scmp.ne.s32.totalorder %s141, %s143
      %p150 = scmp.eq.s32.totalorder %s28, 1
      %p151 = por %p149, %p150
      %p152 = scmp.ne.s32.totalorder %s143, %s144
      %p153 = scmp.eq.s32.totalorder %s28, 0
      %p154 = por %p152, %p153
      %p155 = scmp.ne.s32.totalorder %s143, %s144
      %p156 = scmp.eq.s32.totalorder %s29, 1
      %p157 = por %p155, %p156
      %p159 = scmp.ne.s32.totalorder %s144, %s158
      %p160 = scmp.eq.s32.totalorder %s29, 0
      %p161 = por %p159, %p160
      %s163 = sadd.s32 %s162, 1
      %p166 = scmp.eq.s32.totalorder %s23, 1
      %p167 = scmp.ne.s32.totalorder %s162, %s164
      %p168 = scmp.eq.s32.totalorder %s23, 0
      %p169 = por %p167, %p168
      %p170 = scmp.ne.s32.totalorder %s162, %s164
      %p171 = scmp.eq.s32.totalorder %s28, 1
      %p172 = por %p170, %p171
      %p173 = scmp.ne.s32.totalorder %s164, %s165
      %p174 = scmp.eq.s32.totalorder %s28, 0
      %p175 = por %p173, %p174
      %p176 = scmp.ne.s32.totalorder %s164, %s165
      %p177 = scmp.eq.s32.totalorder %s29, 1
      %p178 = por %p176, %p177
      %p180 = scmp.ne.s32.totalorder %s165, %s179
      %p181 = scmp.eq.s32.totalorder %s29, 0
      %p182 = por %p180, %p181
      %s184 = sadd.s32 %s183, 1
      %p187 = scmp.eq.s32.totalorder %s23, 1
      %p188 = scmp.ne.s32.totalorder %s183, %s185
      %p189 = scmp.eq.s32.totalorder %s23, 0
      %p190 = por %p188, %p189
      %p191 = scmp.ne.s32.totalorder %s183, %s185
      %p192 = scmp.eq.s32.totalorder %s28, 1
      %p193 = por %p191, %p192
      %p194 = scmp.ne.s32.totalorder %s185, %s186
      %p195 = scmp.eq.s32.totalorder %s28, 0
      %p196 = por %p194, %p195
      %p197 = scmp.ne.s32.totalorder %s185, %s186
      %p198 = scmp.eq.s32.totalorder %s29, 1
      %p199 = por %p197, %p198
      %p201 = scmp.ne.s32.totalorder %s186, %s200
      %p202 = scmp.eq.s32.totalorder %s29, 0
      %p203 = por %p201, %p202
      %s205 = sadd.s32 %s204, 1
      %p208 = scmp.eq.s32.totalorder %s23, 1
      %p209 = scmp.ne.s32.totalorder %s204, %s206
      %p210 = scmp.eq.s32.totalorder %s23, 0
      %p211 = por %p209, %p210
      %p212 = scmp.ne.s32.totalorder %s204, %s206
      %p213 = scmp.eq.s32.totalorder %s28, 1
      %p214 = por %p212, %p213
      %p215 = scmp.ne.s32.totalorder %s206, %s207
      %p216 = scmp.eq.s32.totalorder %s28, 0
      %p217 = por %p215, %p216
      %p218 = scmp.ne.s32.totalorder %s206, %s207
      %p219 = scmp.eq.s32.totalorder %s29, 1
      %p220 = por %p218, %p219
      %p222 = scmp.ne.s32.totalorder %s207, %s221
      %p223 = scmp.eq.s32.totalorder %s29, 0
      %p224 = por %p222, %p223
      %s225 = ssub.s32 %s23, %s30
      %p226 = scmp.eq.s32.totalorder %s225, 0
      %s228 = sadd.s32 %s227, 1
      %s229 = scalar_select %p226, %s227, %s228
      %p232 = pneg %p226
      %p233 = scmp.eq.s32.totalorder %s23, 1
      %p234 = por %p232, %p233
      %p235 = scmp.ne.s32.totalorder %s227, %s230
      %p236 = scmp.eq.s32.totalorder %s23, 0
      %p237 = por %p235, %p236
      %p238 = scmp.ne.s32.totalorder %s227, %s230
      %p239 = scmp.eq.s32.totalorder %s28, 1
      %p240 = por %p238, %p239
      %p241 = scmp.ne.s32.totalorder %s230, %s231
      %p242 = scmp.eq.s32.totalorder %s28, 0
      %p243 = por %p241, %p242
      %p244 = scmp.ne.s32.totalorder %s230, %s231
      %p245 = scmp.eq.s32.totalorder %s29, 1
      %p246 = por %p244, %p245
      %p248 = scmp.ne.s32.totalorder %s231, %s247
      %p249 = scmp.eq.s32.totalorder %s29, 0
      %p250 = por %p248, %p249
      %p251 = scmp.le.s32.totalorder 1, %s23
      %p252 = scmp.lt.s32.totalorder %s23, 3
      %p253 = pnand %p251, %p252
      %p254 = pneg %p253
      // Predicated region
      $region9: #{tpu_custom_call.1} parent=5 // pred_check
        _
      $region10: #{tpu_custom_call.1} parent=5 // pred_check_branch
        %256 = sbr.rel (%p253) target = $region12
      $region11: #{tpu_custom_call.1} parent=5 // pred_region
        %s257 = ssub.s32 %s23, 1
        // Predicated region
        $region13: #{tpu_custom_call.1} parent=11 // pred_check
          %p258 = pneg %p70
        $region14: #{tpu_custom_call.1} parent=11 // pred_check_branch
          %260 = sbr.rel (%p258) target = $region16
        $region15: #{tpu_custom_call.1} parent=11 // pred_region
          _
        $region16: #{tpu_custom_call.1} parent=11 // pred_fallthru
          _
        // Predicated region
        $region17: #{tpu_custom_call.1} parent=11 // pred_check
          %p261 = pneg %p91
        $region18: #{tpu_custom_call.1} parent=11 // pred_check_branch
          %263 = sbr.rel (%p261) target = $region20
        $region19: #{tpu_custom_call.1} parent=11 // pred_region
          _
        $region20: #{tpu_custom_call.1} parent=11 // pred_fallthru
          _
        // Predicated region
        $region21: #{tpu_custom_call.1} parent=11 // pred_check
          %p264 = pneg %p112
        $region22: #{tpu_custom_call.1} parent=11 // pred_check_branch
          %266 = sbr.rel (%p264) target = $region24
        $region23: #{tpu_custom_call.1} parent=11 // pred_region
          %s268 = ssub.s32 512, 512
          %269 = vsyncadd [#allocation6], %s268
          %s270 = sshll.u32 [#allocation5], 4
          %s271 = int_to_ptr.vmem [resolvable:$true] %s270
          %276 = dma.hbm_to_vmem [thread:$0]  %s3, 512, %s271, [#allocation6], 128, 128, 8
        $region24: #{tpu_custom_call.1} parent=11 // pred_fallthru
          _
        // Predicated region
        $region25: #{tpu_custom_call.1} parent=11 // pred_check
          %p277 = pneg %p133
        $region26: #{tpu_custom_call.1} parent=11 // pred_check_branch
          %279 = sbr.rel (%p277) target = $region28
        $region27: #{tpu_custom_call.1} parent=11 // pred_region
          _
        $region28: #{tpu_custom_call.1} parent=11 // pred_fallthru
          _
        // Predicated region
        $region29: #{tpu_custom_call.1} parent=11 // pred_check
          %p280 = pneg %p154
        $region30: #{tpu_custom_call.1} parent=11 // pred_check_branch
          %282 = sbr.rel (%p280) target = $region32
        $region31: #{tpu_custom_call.1} parent=11 // pred_region
          %s284 = ssub.s32 512, 512
          %285 = vsyncadd [#allocation6], %s284
          %s286 = sshll.u32 [#allocation7], 4
          %s287 = int_to_ptr.vmem [resolvable:$true] %s286
          %292 = dma.hbm_to_vmem [thread:$0]  %s5, 512, %s287, [#allocation6], 128, 128, 8
        $region32: #{tpu_custom_call.1} parent=11 // pred_fallthru
          _
        // Predicated region
        $region33: #{tpu_custom_call.1} parent=11 // pred_check
          %p293 = pneg %p175
        $region34: #{tpu_custom_call.1} parent=11 // pred_check_branch
          %295 = sbr.rel (%p293) target = $region36
        $region35: #{tpu_custom_call.1} parent=11 // pred_region
          _
        $region36: #{tpu_custom_call.1} parent=11 // pred_fallthru
          _
        // Predicated region
        $region37: #{tpu_custom_call.1} parent=11 // pred_check
          %p296 = pneg %p196
        $region38: #{tpu_custom_call.1} parent=11 // pred_check_branch
          %298 = sbr.rel (%p296) target = $region40
        $region39: #{tpu_custom_call.1} parent=11 // pred_region
          %s300 = ssub.s32 512, 512
          %301 = vsyncadd [#allocation9], %s300
          %s302 = sshll.u32 [#allocation8], 4
          %s303 = int_to_ptr.vmem [resolvable:$true] %s302
          %308 = dma.hbm_to_vmem [thread:$0]  %s7, 512, %s303, [#allocation9], 128, 128, 8
        $region40: #{tpu_custom_call.1} parent=11 // pred_fallthru
          _
        // Predicated region
        $region41: #{tpu_custom_call.1} parent=11 // pred_check
          %p309 = pneg %p217
        $region42: #{tpu_custom_call.1} parent=11 // pred_check_branch
          %311 = sbr.rel (%p309) target = $region44
        $region43: #{tpu_custom_call.1} parent=11 // pred_region
          _
        $region44: #{tpu_custom_call.1} parent=11 // pred_fallthru
          _
      $region12: #{tpu_custom_call.1} parent=5 // pred_fallthru
        _
      %p312 = scmp.lt.s32.totalorder %s23, 2
      // Predicated region
      $region45: #{tpu_custom_call.1} parent=5 // pred_check
        %p313 = pneg %p312
      $region46: #{tpu_custom_call.1} parent=5 // pred_check_branch
        %315 = sbr.rel (%p313) target = $region48
      $region47: #{tpu_custom_call.1} parent=5 // pred_region
        // Predicated region
        $region49: #{tpu_custom_call.1} parent=47 // pred_check
          %p316 = pneg %p43
        $region50: #{tpu_custom_call.1} parent=47 // pred_check_branch
          %318 = sbr.rel (%p316) target = $region52
        $region51: #{tpu_custom_call.1} parent=47 // pred_region
          %s319 = sand.u32 %s33, 1
          %s320 = scalar_lea.sflag [#allocation3], %s319
          %s321 = sand.u32 %s33, 1
          %s322 = smul.addr %s321, 8
          %s323 = scalar_lea.vmem [#allocation2], %s322
          %s325 = ssub.s32 128, 128
          %326 = vsyncadd %s320, %s325
          %s327 = smul.addr %s23, 128
          %s328 = scalar_lea.hbm %s0, %s327
          %s330 = sshll.u32 %s323, 4
          %s331 = int_to_ptr.vmem [resolvable:$true] %s330
          %333 = dma.hbm_to_vmem [thread:$0]  %s328, 128, %s331, %s320
        $region52: #{tpu_custom_call.1} parent=47 // pred_fallthru
          _
      $region48: #{tpu_custom_call.1} parent=5 // pred_fallthru
        _
      %p334 = scmp.le.s32.totalorder 1, %s23
      %p335 = scmp.lt.s32.totalorder %s23, 3
      %p336 = pnand %p334, %p335
      %p337 = pneg %p336
      // Predicated region
      $region53: #{tpu_custom_call.1} parent=5 // pred_check
        _
      $region54: #{tpu_custom_call.1} parent=5 // pred_check_branch
        %339 = sbr.rel (%p336) target = $region56
      $region55: #{tpu_custom_call.1} parent=5 // pred_region
        %s340 = ssub.s32 %s23, 1
        %s341 = sand.u32 %s36, 1
        %s342 = scalar_lea.sflag [#allocation3], %s341
        %s343 = sand.u32 %s36, 1
        %s344 = smul.addr %s343, 8
        %s345 = scalar_lea.vmem [#allocation2], %s344
        // Predicated region
        $region57: #{tpu_custom_call.1} parent=55 // pred_check
          %p346 = pneg %p49
        $region58: #{tpu_custom_call.1} parent=55 // pred_check_branch
          %348 = sbr.rel (%p346) target = $region60
        $region59: #{tpu_custom_call.1} parent=55 // pred_region
          %349 = dma.done %s342, 128
        $region60: #{tpu_custom_call.1} parent=55 // pred_fallthru
          _
        // Predicated region
        $region61: #{tpu_custom_call.1} parent=55 // pred_check
          %p350 = pneg %p112
        $region62: #{tpu_custom_call.1} parent=55 // pred_check_branch
          %352 = sbr.rel (%p350) target = $region64
        $region63: #{tpu_custom_call.1} parent=55 // pred_region
          %353 = dma.done [#allocation6], 512
        $region64: #{tpu_custom_call.1} parent=55 // pred_fallthru
          _
        // Predicated region
        $region65: #{tpu_custom_call.1} parent=55 // pred_check
          %p354 = pneg %p154
        $region66: #{tpu_custom_call.1} parent=55 // pred_check_branch
          %356 = sbr.rel (%p354) target = $region68
        $region67: #{tpu_custom_call.1} parent=55 // pred_region
          %357 = dma.done [#allocation6], 512
        $region68: #{tpu_custom_call.1} parent=55 // pred_fallthru
          _
        // Predicated region
        $region69: #{tpu_custom_call.1} parent=55 // pred_check
          %p358 = pneg %p196
        $region70: #{tpu_custom_call.1} parent=55 // pred_check_branch
          %360 = sbr.rel (%p358) target = $region72
        $region71: #{tpu_custom_call.1} parent=55 // pred_region
          %361 = dma.done [#allocation9], 512
        $region72: #{tpu_custom_call.1} parent=55 // pred_fallthru
          _
        %s362 = sand.u32 %s36, 1
        %s363 = scalar_lea.sflag [#allocation3], %s362
        %s364 = sand.u32 %s36, 1
        %s365 = smul.addr %s364, 8
        %s366 = scalar_lea.vmem [#allocation2], %s365
        %p367 = pneg %p49
        %p368 = pneg %p46
        %p369 = pneg %p70
        %p370 = pneg %p67
        %p371 = pneg %p91
        %p372 = pneg %p88
        %p373 = pneg %p112
        %p374 = pneg %p109
        %p375 = pneg %p133
        %p376 = pneg %p130
        %p377 = pneg %p154
        %p378 = pneg %p151
        %p379 = pneg %p175
        %p380 = pneg %p172
        %p381 = pneg %p196
        %p382 = pneg %p193
        %p383 = pneg %p217
        %p384 = pneg %p214
        %p385 = pneg %p243
        %p386 = pneg %p240
        %s387 = sand.u32 %s230, 1
        %s388 = scalar_lea.sflag [#allocation4], %s387
        %s389 = sand.u32 %s230, 1
        %s390 = smul.addr %s389, 8
        %s391 = scalar_lea.vmem [#allocation10], %s390
        %v392 = vld [vmem:[%s345] sm:$0xff]
        %vm393 = vcmask 261120
        %v394 = vsel %vm393, %v392, 0.0
        %395 = vadd.xlane.f32.xlu0 %v394
        %v396 = vpop.xlane.xlu0 %395
        %v397 = vrcp.pop 32.0
        %v398 = vmul.f32 %v396, %v397
        %v399 = vsub.f32 %v392, %v398
        %v400 = vmul.f32 %v399, %v399
        %v401 = vsel %vm393, %v400, 0.0
        %402 = vadd.xlane.f32.xlu0 %v401
        %v403 = vpop.xlane.xlu0 %402
        %v404 = vmul.f32 %v403, %v397
        %v405 = vadd.f32 %v404, 1e-05
        %v406 = vrsqrt.pop %v405
        %v407 = vmul.f32 %v399, %v406
        %v408 = vld [vmem:[%s1] sm:$0x1]
        %v410 = vlaneseq
        %v411 = vshrl.u32 %v410, 7
        %v412 = vsub.s32 0, %v411
        %v413 = vrot.slane %v408, %v412
        %v415 = vmul.f32 %v407, %v413
        %v416 = vld [vmem:[%s2] sm:$0x1]
        %v418 = vlaneseq
        %v419 = vshrl.u32 %v418, 7
        %v420 = vsub.s32 0, %v419
        %v421 = vrot.slane %v416, %v420
        %v423 = vadd.f32 %v415, %v421
        %v424 = vld [vmem:[#allocation5] sm:$0xff]
        %v425 = vld [vmem:[#allocation5 + $0x8] sm:$0xff]
        %v426 = vld [vmem:[#allocation5 + $0x10] sm:$0xff]
        %v427 = vld [vmem:[#allocation5 + $0x18] sm:$0xff]
        %v428 = vld [vmem:[%s4] sm:$0x1]
        %v430 = vlaneseq
        %v431 = vshrl.u32 %v430, 7
        %v432 = vsub.s32 0, %v431
        %v433 = vrot.slane %v428, %v432
        %v436 = vsel %vm393, %v423, 0
        %438 = vmatprep.subr.mxu0 0.0
        %439 = vmatpush1.msra.mxu0 %v424
        %440 = vmatprep.subr.mxu0 0.0
        %441 = vmatpush1.msra.mxu0 %v425
        %442 = vmatprep.subr.mxu0 0.0
        %443 = vmatpush1.msra.mxu0 %v426
        %444 = vmatprep.subr.mxu0 0.0
        %445 = vmatpush1.msra.mxu0 %v427
        %446 = vmatprep.subr.mxu0 0.0
        %447 = vmatpush1.msra.mxu0 0.0
        %448 = vmatprep.subr.mxu0 0.0
        %449 = vmatpush1.msra.mxu0 0.0
        %450 = vmatprep.subr.mxu0 0.0
        %451 = vmatpush1.msra.mxu0 0.0
        %452 = vmatprep.subr.mxu0 0.0
        %453 = vmatpush1.msra.mxu0 0.0
        %454 = vmatprep.subr.mxu0 0.0
        %455 = vmatpush1.msra.mxu0 0.0
        %456 = vmatprep.subr.mxu0 0.0
        %457 = vmatpush1.msra.mxu0 0.0
        %458 = vmatprep.subr.mxu0 0.0
        %459 = vmatpush1.msra.mxu0 0.0
        %460 = vmatprep.subr.mxu0 0.0
        %461 = vmatpush1.msra.mxu0 0.0
        %462 = vmatprep.subr.mxu0 0.0
        %463 = vmatpush1.msra.mxu0 0.0
        %464 = vmatprep.subr.mxu0 0.0
        %465 = vmatpush1.msra.mxu0 0.0
        %466 = vmatprep.subr.mxu0 0.0
        %467 = vmatpush1.msra.mxu0 0.0
        %468 = vmatprep.subr.mxu0 0.0
        %469 = vmatpush1.msra.mxu0 0.0
        %470 = vmatprep.subr.mxu0 0.0
        %471 = vmatpush1.msra.mxu0 0.0
        %472 = vmatprep.subr.mxu0 0.0
        %473 = vmatpush1.msra.mxu0 0.0
        %474 = vmatprep.subr.mxu0 0.0
        %475 = vmatpush1.msra.mxu0 0.0
        %476 = vmatprep.subr.mxu0 0.0
        %477 = vmatpush1.msra.mxu0 0.0
        %478 = vmatprep.subr.mxu0 0.0
        %479 = vmatpush1.msra.mxu0 0.0
        %480 = vmatprep.subr.mxu0 0.0
        %481 = vmatpush1.msra.mxu0 0.0
        %482 = vmatprep.subr.mxu0 0.0
        %483 = vmatpush1.msra.mxu0 0.0
        %484 = vmatprep.subr.mxu0 0.0
        %485 = vmatpush1.msra.mxu0 0.0
        %486 = vmatprep.subr.mxu0 0.0
        %487 = vmatpush1.msra.mxu0 0.0
        %488 = vmatprep.subr.mxu0 0.0
        %489 = vmatpush1.msra.mxu0 0.0
        %490 = vmatprep.subr.mxu0 0.0
        %491 = vmatpush1.msra.mxu0 0.0
        %492 = vmatprep.subr.mxu0 0.0
        %493 = vmatpush1.msra.mxu0 0.0
        %494 = vmatprep.subr.mxu0 0.0
        %495 = vmatpush1.msra.mxu0 0.0
        %496 = vmatprep.subr.mxu0 0.0
        %497 = vmatpush1.msra.mxu0 0.0
        %498 = vmatprep.subr.mxu0 0.0
        %499 = vmatpush1.msra.mxu0 0.0
        %500 = vmatprep.subr.mxu0 0.0
        %501 = vmatpush1.msra.mxu0 0.0
        %502 = vmatprep.mubr.f32.mxu0 0.0
        %503 = vmatmul.mubr.f32.gmra.mrb[0].mxu0 %v436
        %v504 = vpop.f32.mrb[0].mxu0
        %v505 = vadd.f32 %v433, %v504
        %v506 = vpop.f32.mrb[0].mxu0
        %507 = vdwg.mxu0
        %v508 = vld [vmem:[#allocation7] sm:$0xff]
        %v509 = vld [vmem:[#allocation7 + $0x8] sm:$0xff]
        %v510 = vld [vmem:[#allocation7 + $0x10] sm:$0xff]
        %v511 = vld [vmem:[#allocation7 + $0x18] sm:$0xff]
        %v512 = vld [vmem:[%s6] sm:$0x1]
        %v514 = vlaneseq
        %v515 = vshrl.u32 %v514, 7
        %v516 = vsub.s32 0, %v515
        %v517 = vrot.slane %v512, %v516
        %519 = vmatprep.subr.mxu0 0.0
        %520 = vmatpush1.msra.mxu0 %v508
        %521 = vmatprep.subr.mxu0 0.0
        %522 = vmatpush1.msra.mxu0 %v509
        %523 = vmatprep.subr.mxu0 0.0
        %524 = vmatpush1.msra.mxu0 %v510
        %525 = vmatprep.subr.mxu0 0.0
        %526 = vmatpush1.msra.mxu0 %v511
        %527 = vmatprep.subr.mxu0 0.0
        %528 = vmatpush1.msra.mxu0 0.0
        %529 = vmatprep.subr.mxu0 0.0
        %530 = vmatpush1.msra.mxu0 0.0
        %531 = vmatprep.subr.mxu0 0.0
        %532 = vmatpush1.msra.mxu0 0.0
        %533 = vmatprep.subr.mxu0 0.0
        %534 = vmatpush1.msra.mxu0 0.0
        %535 = vmatprep.subr.mxu0 0.0
        %536 = vmatpush1.msra.mxu0 0.0
        %537 = vmatprep.subr.mxu0 0.0
        %538 = vmatpush1.msra.mxu0 0.0
        %539 = vmatprep.subr.mxu0 0.0
        %540 = vmatpush1.msra.mxu0 0.0
        %541 = vmatprep.subr.mxu0 0.0
        %542 = vmatpush1.msra.mxu0 0.0
        %543 = vmatprep.subr.mxu0 0.0
        %544 = vmatpush1.msra.mxu0 0.0
        %545 = vmatprep.subr.mxu0 0.0
        %546 = vmatpush1.msra.mxu0 0.0
        %547 = vmatprep.subr.mxu0 0.0
        %548 = vmatpush1.msra.mxu0 0.0
        %549 = vmatprep.subr.mxu0 0.0
        %550 = vmatpush1.msra.mxu0 0.0
        %551 = vmatprep.subr.mxu0 0.0
        %552 = vmatpush1.msra.mxu0 0.0
        %553 = vmatprep.subr.mxu0 0.0
        %554 = vmatpush1.msra.mxu0 0.0
        %555 = vmatprep.subr.mxu0 0.0
        %556 = vmatpush1.msra.mxu0 0.0
        %557 = vmatprep.subr.mxu0 0.0
        %558 = vmatpush1.msra.mxu0 0.0
        %559 = vmatprep.subr.mxu0 0.0
        %560 = vmatpush1.msra.mxu0 0.0
        %561 = vmatprep.subr.mxu0 0.0
        %562 = vmatpush1.msra.mxu0 0.0
        %563 = vmatprep.subr.mxu0 0.0
        %564 = vmatpush1.msra.mxu0 0.0
        %565 = vmatprep.subr.mxu0 0.0
        %566 = vmatpush1.msra.mxu0 0.0
        %567 = vmatprep.subr.mxu0 0.0
        %568 = vmatpush1.msra.mxu0 0.0
        %569 = vmatprep.subr.mxu0 0.0
        %570 = vmatpush1.msra.mxu0 0.0
        %571 = vmatprep.subr.mxu0 0.0
        %572 = vmatpush1.msra.mxu0 0.0
        %573 = vmatprep.subr.mxu0 0.0
        %574 = vmatpush1.msra.mxu0 0.0
        %575 = vmatprep.subr.mxu0 0.0
        %576 = vmatpush1.msra.mxu0 0.0
        %577 = vmatprep.subr.mxu0 0.0
        %578 = vmatpush1.msra.mxu0 0.0
        %579 = vmatprep.subr.mxu0 0.0
        %580 = vmatpush1.msra.mxu0 0.0
        %581 = vmatprep.subr.mxu0 0.0
        %582 = vmatpush1.msra.mxu0 0.0
        %583 = vmatprep.mubr.f32.mxu0 0.0
        %584 = vmatmul.mubr.f32.gmra.mrb[0].mxu0 %v436
        %v585 = vpop.f32.mrb[0].mxu0
        %v586 = vadd.f32 %v517, %v585
        %v587 = vpop.f32.mrb[0].mxu0
        %588 = vdwg.mxu0
        %v589 = vld [vmem:[#allocation8] sm:$0xff]
        %v590 = vld [vmem:[#allocation8 + $0x8] sm:$0xff]
        %v591 = vld [vmem:[#allocation8 + $0x10] sm:$0xff]
        %v592 = vld [vmem:[#allocation8 + $0x18] sm:$0xff]
        %v593 = vld [vmem:[%s8] sm:$0x1]
        %v595 = vlaneseq
        %v596 = vshrl.u32 %v595, 7
        %v597 = vsub.s32 0, %v596
        %v598 = vrot.slane %v593, %v597
        %600 = vmatprep.subr.mxu0 0.0
        %601 = vmatpush1.msra.mxu0 %v589
        %602 = vmatprep.subr.mxu0 0.0
        %603 = vmatpush1.msra.mxu0 %v590
        %604 = vmatprep.subr.mxu0 0.0
        %605 = vmatpush1.msra.mxu0 %v591
        %606 = vmatprep.subr.mxu0 0.0
        %607 = vmatpush1.msra.mxu0 %v592
        %608 = vmatprep.subr.mxu0 0.0
        %609 = vmatpush1.msra.mxu0 0.0
        %610 = vmatprep.subr.mxu0 0.0
        %611 = vmatpush1.msra.mxu0 0.0
        %612 = vmatprep.subr.mxu0 0.0
        %613 = vmatpush1.msra.mxu0 0.0
        %614 = vmatprep.subr.mxu0 0.0
        %615 = vmatpush1.msra.mxu0 0.0
        %616 = vmatprep.subr.mxu0 0.0
        %617 = vmatpush1.msra.mxu0 0.0
        %618 = vmatprep.subr.mxu0 0.0
        %619 = vmatpush1.msra.mxu0 0.0
        %620 = vmatprep.subr.mxu0 0.0
        %621 = vmatpush1.msra.mxu0 0.0
        %622 = vmatprep.subr.mxu0 0.0
        %623 = vmatpush1.msra.mxu0 0.0
        %624 = vmatprep.subr.mxu0 0.0
        %625 = vmatpush1.msra.mxu0 0.0
        %626 = vmatprep.subr.mxu0 0.0
        %627 = vmatpush1.msra.mxu0 0.0
        %628 = vmatprep.subr.mxu0 0.0
        %629 = vmatpush1.msra.mxu0 0.0
        %630 = vmatprep.subr.mxu0 0.0
        %631 = vmatpush1.msra.mxu0 0.0
        %632 = vmatprep.subr.mxu0 0.0
        %633 = vmatpush1.msra.mxu0 0.0
        %634 = vmatprep.subr.mxu0 0.0
        %635 = vmatpush1.msra.mxu0 0.0
        %636 = vmatprep.subr.mxu0 0.0
        %637 = vmatpush1.msra.mxu0 0.0
        %638 = vmatprep.subr.mxu0 0.0
        %639 = vmatpush1.msra.mxu0 0.0
        %640 = vmatprep.subr.mxu0 0.0
        %641 = vmatpush1.msra.mxu0 0.0
        %642 = vmatprep.subr.mxu0 0.0
        %643 = vmatpush1.msra.mxu0 0.0
        %644 = vmatprep.subr.mxu0 0.0
        %645 = vmatpush1.msra.mxu0 0.0
        %646 = vmatprep.subr.mxu0 0.0
        %647 = vmatpush1.msra.mxu0 0.0
        %648 = vmatprep.subr.mxu0 0.0
        %649 = vmatpush1.msra.mxu0 0.0
        %650 = vmatprep.subr.mxu0 0.0
        %651 = vmatpush1.msra.mxu0 0.0
        %652 = vmatprep.subr.mxu0 0.0
        %653 = vmatpush1.msra.mxu0 0.0
        %654 = vmatprep.subr.mxu0 0.0
        %655 = vmatpush1.msra.mxu0 0.0
        %656 = vmatprep.subr.mxu0 0.0
        %657 = vmatpush1.msra.mxu0 0.0
        %658 = vmatprep.subr.mxu0 0.0
        %659 = vmatpush1.msra.mxu0 0.0
        %660 = vmatprep.subr.mxu0 0.0
        %661 = vmatpush1.msra.mxu0 0.0
        %662 = vmatprep.subr.mxu0 0.0
        %663 = vmatpush1.msra.mxu0 0.0
        %664 = vmatprep.mubr.f32.mxu0 0.0
        %665 = vmatmul.mubr.f32.gmra.mrb[0].mxu0 %v436
        %v666 = vpop.f32.mrb[0].mxu0
        %v667 = vadd.f32 %v598, %v666
        %v668 = vpop.f32.mrb[0].mxu0
        %669 = vdwg.mxu0
        %v670 = vmul.f32 %v505, 0.35355338
        %vm671 = vcmask 64512
        %v673 = vsel %vm671, %v670, 0
        %v676 = vsel %vm671, %v586, 0
        %678 = vmatprep.subr.mxu0 0.0
        %679 = vmatpush1.xpose.msra.mxu0 %v676
        %680 = vmatprep.subr.mxu0 0.0
        %681 = vmatpush1.xpose.msra.mxu0 0.0
        %682 = vmatprep.subr.mxu0 0.0
        %683 = vmatpush1.xpose.msra.mxu0 0.0
        %684 = vmatprep.subr.mxu0 0.0
        %685 = vmatpush1.xpose.msra.mxu0 0.0
        %686 = vmatprep.subr.mxu0 0.0
        %687 = vmatpush1.xpose.msra.mxu0 0.0
        %688 = vmatprep.subr.mxu0 0.0
        %689 = vmatpush1.xpose.msra.mxu0 0.0
        %690 = vmatprep.subr.mxu0 0.0
        %691 = vmatpush1.xpose.msra.mxu0 0.0
        %692 = vmatprep.subr.mxu0 0.0
        %693 = vmatpush1.xpose.msra.mxu0 0.0
        %694 = vmatprep.subr.mxu0 0.0
        %695 = vmatpush1.xpose.msra.mxu0 0.0
        %696 = vmatprep.subr.mxu0 0.0
        %697 = vmatpush1.xpose.msra.mxu0 0.0
        %698 = vmatprep.subr.mxu0 0.0
        %699 = vmatpush1.xpose.msra.mxu0 0.0
        %700 = vmatprep.subr.mxu0 0.0
        %701 = vmatpush1.xpose.msra.mxu0 0.0
        %702 = vmatprep.subr.mxu0 0.0
        %703 = vmatpush1.xpose.msra.mxu0 0.0
        %704 = vmatprep.subr.mxu0 0.0
        %705 = vmatpush1.xpose.msra.mxu0 0.0
        %706 = vmatprep.subr.mxu0 0.0
        %707 = vmatpush1.xpose.msra.mxu0 0.0
        %708 = vmatprep.subr.mxu0 0.0
        %709 = vmatpush1.xpose.msra.mxu0 0.0
        %710 = vmatprep.subr.mxu0 0.0
        %711 = vmatpush1.xpose.msra.mxu0 0.0
        %712 = vmatprep.subr.mxu0 0.0
        %713 = vmatpush1.xpose.msra.mxu0 0.0
        %714 = vmatprep.subr.mxu0 0.0
        %715 = vmatpush1.xpose.msra.mxu0 0.0
        %716 = vmatprep.subr.mxu0 0.0
        %717 = vmatpush1.xpose.msra.mxu0 0.0
        %718 = vmatprep.subr.mxu0 0.0
        %719 = vmatpush1.xpose.msra.mxu0 0.0
        %720 = vmatprep.subr.mxu0 0.0
        %721 = vmatpush1.xpose.msra.mxu0 0.0
        %722 = vmatprep.subr.mxu0 0.0
        %723 = vmatpush1.xpose.msra.mxu0 0.0
        %724 = vmatprep.subr.mxu0 0.0
        %725 = vmatpush1.xpose.msra.mxu0 0.0
        %726 = vmatprep.subr.mxu0 0.0
        %727 = vmatpush1.xpose.msra.mxu0 0.0
        %728 = vmatprep.subr.mxu0 0.0
        %729 = vmatpush1.xpose.msra.mxu0 0.0
        %730 = vmatprep.subr.mxu0 0.0
        %731 = vmatpush1.xpose.msra.mxu0 0.0
        %732 = vmatprep.subr.mxu0 0.0
        %733 = vmatpush1.xpose.msra.mxu0 0.0
        %734 = vmatprep.subr.mxu0 0.0
        %735 = vmatpush1.xpose.msra.mxu0 0.0
        %736 = vmatprep.subr.mxu0 0.0
        %737 = vmatpush1.xpose.msra.mxu0 0.0
        %738 = vmatprep.subr.mxu0 0.0
        %739 = vmatpush1.xpose.msra.mxu0 0.0
        %740 = vmatprep.subr.mxu0 0.0
        %741 = vmatpush1.xpose.msra.mxu0 0.0
        %742 = vmatprep.mubr.f32.mxu0 0.0
        %743 = vmatmul.mubr.f32.gmra.mrb[0].mxu0 %v673
        %v744 = vpop.f32.mrb[0].mxu0
        %v745 = vadd.f32 0.0, %v744
        %v746 = vpop.f32.mrb[0].mxu0
        %747 = vdwg.mxu0
        %v748 = vsel %vm671, %v745, -inf
        %749 = vmax.xlane.f32.xlu0 %v748
        %v750 = vpop.xlane.xlu0 %749
        %v751 = vsub.f32 %v745, %v750
        %v752 = vmul.f32 %v751, 1.442695
        %v753 = vpow.pop %v752
        %v754 = vsel %vm671, %v753, 0.0
        %755 = vadd.xlane.f32.xlu0 %v754
        %v756 = vpop.xlane.xlu0 %755
        %v758 = vsel %vm671, %v753, 0
        %760 = vmatprep.subr.mxu0 0.0
        %761 = vmatpush1.msra.mxu0 %v667
        %762 = vmatprep.subr.mxu0 0.0
        %763 = vmatpush1.msra.mxu0 0.0
        %764 = vmatprep.subr.mxu0 0.0
        %765 = vmatpush1.msra.mxu0 0.0
        %766 = vmatprep.subr.mxu0 0.0
        %767 = vmatpush1.msra.mxu0 0.0
        %768 = vmatprep.subr.mxu0 0.0
        %769 = vmatpush1.msra.mxu0 0.0
        %770 = vmatprep.subr.mxu0 0.0
        %771 = vmatpush1.msra.mxu0 0.0
        %772 = vmatprep.subr.mxu0 0.0
        %773 = vmatpush1.msra.mxu0 0.0
        %774 = vmatprep.subr.mxu0 0.0
        %775 = vmatpush1.msra.mxu0 0.0
        %776 = vmatprep.subr.mxu0 0.0
        %777 = vmatpush1.msra.mxu0 0.0
        %778 = vmatprep.subr.mxu0 0.0
        %779 = vmatpush1.msra.mxu0 0.0
        %780 = vmatprep.subr.mxu0 0.0
        %781 = vmatpush1.msra.mxu0 0.0
        %782 = vmatprep.subr.mxu0 0.0
        %783 = vmatpush1.msra.mxu0 0.0
        %784 = vmatprep.subr.mxu0 0.0
        %785 = vmatpush1.msra.mxu0 0.0
        %786 = vmatprep.subr.mxu0 0.0
        %787 = vmatpush1.msra.mxu0 0.0
        %788 = vmatprep.subr.mxu0 0.0
        %789 = vmatpush1.msra.mxu0 0.0
        %790 = vmatprep.subr.mxu0 0.0
        %791 = vmatpush1.msra.mxu0 0.0
        %792 = vmatprep.subr.mxu0 0.0
        %793 = vmatpush1.msra.mxu0 0.0
        %794 = vmatprep.subr.mxu0 0.0
        %795 = vmatpush1.msra.mxu0 0.0
        %796 = vmatprep.subr.mxu0 0.0
        %797 = vmatpush1.msra.mxu0 0.0
        %798 = vmatprep.subr.mxu0 0.0
        %799 = vmatpush1.msra.mxu0 0.0
        %800 = vmatprep.subr.mxu0 0.0
        %801 = vmatpush1.msra.mxu0 0.0
        %802 = vmatprep.subr.mxu0 0.0
        %803 = vmatpush1.msra.mxu0 0.0
        %804 = vmatprep.subr.mxu0 0.0
        %805 = vmatpush1.msra.mxu0 0.0
        %806 = vmatprep.subr.mxu0 0.0
        %807 = vmatpush1.msra.mxu0 0.0
        %808 = vmatprep.subr.mxu0 0.0
        %809 = vmatpush1.msra.mxu0 0.0
        %810 = vmatprep.subr.mxu0 0.0
        %811 = vmatpush1.msra.mxu0 0.0
        %812 = vmatprep.subr.mxu0 0.0
        %813 = vmatpush1.msra.mxu0 0.0
        %814 = vmatprep.subr.mxu0 0.0
        %815 = vmatpush1.msra.mxu0 0.0
        %816 = vmatprep.subr.mxu0 0.0
        %817 = vmatpush1.msra.mxu0 0.0
        %818 = vmatprep.subr.mxu0 0.0
        %819 = vmatpush1.msra.mxu0 0.0
        %820 = vmatprep.subr.mxu0 0.0
        %821 = vmatpush1.msra.mxu0 0.0
        %822 = vmatprep.subr.mxu0 0.0
        %823 = vmatpush1.msra.mxu0 0.0
        %824 = vmatprep.mubr.f32.mxu0 0.0
        %825 = vmatmul.mubr.f32.gmra.mrb[0].mxu0 %v758
        %v826 = vpop.f32.mrb[0].mxu0
        %v827 = vadd.f32 0.0, %v826
        %v828 = vpop.f32.mrb[0].mxu0
        %829 = vdwg.mxu0
        %v830 = vrcp.pop %v756
        %v831 = vmul.f32 %v827, %v830
        %832 = vrot.lane.b32.xlu0 %v670, 120
        %v833 = vpop.permute.xlu0 %832
        %834 = vrot.lane.b32.xlu0 %v586, 120
        %v835 = vpop.permute.xlu0 %834
        %v836 = vsel %vm671, %v833, 0
        %v838 = vsel %vm671, %v835, 0
        %840 = vmatprep.subr.mxu0 0.0
        %841 = vmatpush1.xpose.msra.mxu0 %v838
        %842 = vmatprep.subr.mxu0 0.0
        %843 = vmatpush1.xpose.msra.mxu0 0.0
        %844 = vmatprep.subr.mxu0 0.0
        %845 = vmatpush1.xpose.msra.mxu0 0.0
        %846 = vmatprep.subr.mxu0 0.0
        %847 = vmatpush1.xpose.msra.mxu0 0.0
        %848 = vmatprep.subr.mxu0 0.0
        %849 = vmatpush1.xpose.msra.mxu0 0.0
        %850 = vmatprep.subr.mxu0 0.0
        %851 = vmatpush1.xpose.msra.mxu0 0.0
        %852 = vmatprep.subr.mxu0 0.0
        %853 = vmatpush1.xpose.msra.mxu0 0.0
        %854 = vmatprep.subr.mxu0 0.0
        %855 = vmatpush1.xpose.msra.mxu0 0.0
        %856 = vmatprep.subr.mxu0 0.0
        %857 = vmatpush1.xpose.msra.mxu0 0.0
        %858 = vmatprep.subr.mxu0 0.0
        %859 = vmatpush1.xpose.msra.mxu0 0.0
        %860 = vmatprep.subr.mxu0 0.0
        %861 = vmatpush1.xpose.msra.mxu0 0.0
        %862 = vmatprep.subr.mxu0 0.0
        %863 = vmatpush1.xpose.msra.mxu0 0.0
        %864 = vmatprep.subr.mxu0 0.0
        %865 = vmatpush1.xpose.msra.mxu0 0.0
        %866 = vmatprep.subr.mxu0 0.0
        %867 = vmatpush1.xpose.msra.mxu0 0.0
        %868 = vmatprep.subr.mxu0 0.0
        %869 = vmatpush1.xpose.msra.mxu0 0.0
        %870 = vmatprep.subr.mxu0 0.0
        %871 = vmatpush1.xpose.msra.mxu0 0.0
        %872 = vmatprep.subr.mxu0 0.0
        %873 = vmatpush1.xpose.msra.mxu0 0.0
        %874 = vmatprep.subr.mxu0 0.0
        %875 = vmatpush1.xpose.msra.mxu0 0.0
        %876 = vmatprep.subr.mxu0 0.0
        %877 = vmatpush1.xpose.msra.mxu0 0.0
        %878 = vmatprep.subr.mxu0 0.0
        %879 = vmatpush1.xpose.msra.mxu0 0.0
        %880 = vmatprep.subr.mxu0 0.0
        %881 = vmatpush1.xpose.msra.mxu0 0.0
        %882 = vmatprep.subr.mxu0 0.0
        %883 = vmatpush1.xpose.msra.mxu0 0.0
        %884 = vmatprep.subr.mxu0 0.0
        %885 = vmatpush1.xpose.msra.mxu0 0.0
        %886 = vmatprep.subr.mxu0 0.0
        %887 = vmatpush1.xpose.msra.mxu0 0.0
        %888 = vmatprep.subr.mxu0 0.0
        %889 = vmatpush1.xpose.msra.mxu0 0.0
        %890 = vmatprep.subr.mxu0 0.0
        %891 = vmatpush1.xpose.msra.mxu0 0.0
        %892 = vmatprep.subr.mxu0 0.0
        %893 = vmatpush1.xpose.msra.mxu0 0.0
        %894 = vmatprep.subr.mxu0 0.0
        %895 = vmatpush1.xpose.msra.mxu0 0.0
        %896 = vmatprep.subr.mxu0 0.0
        %897 = vmatpush1.xpose.msra.mxu0 0.0
        %898 = vmatprep.subr.mxu0 0.0
        %899 = vmatpush1.xpose.msra.mxu0 0.0
        %900 = vmatprep.subr.mxu0 0.0
        %901 = vmatpush1.xpose.msra.mxu0 0.0
        %902 = vmatprep.subr.mxu0 0.0
        %903 = vmatpush1.xpose.msra.mxu0 0.0
        %904 = vmatprep.mubr.f32.mxu0 0.0
        %905 = vmatmul.mubr.f32.gmra.mrb[0].mxu0 %v836
        %v906 = vpop.f32.mrb[0].mxu0
        %v907 = vadd.f32 0.0, %v906
        %v908 = vpop.f32.mrb[0].mxu0
        %909 = vdwg.mxu0
        %v910 = vsel %vm671, %v907, -inf
        %911 = vmax.xlane.f32.xlu0 %v910
        %v912 = vpop.xlane.xlu0 %911
        %v913 = vsub.f32 %v907, %v912
        %v914 = vmul.f32 %v913, 1.442695
        %v915 = vpow.pop %v914
        %v916 = vsel %vm671, %v915, 0.0
        %917 = vadd.xlane.f32.xlu0 %v916
        %v918 = vpop.xlane.xlu0 %917
        %920 = vrot.lane.b32.xlu0 %v667, 120
        %v921 = vpop.permute.xlu0 %920
        %v924 = vsel %vm671, %v915, 0
        %926 = vmatprep.subr.mxu0 0.0
        %927 = vmatpush1.msra.mxu0 %v921
        %928 = vmatprep.subr.mxu0 0.0
        %929 = vmatpush1.msra.mxu0 0.0
        %930 = vmatprep.subr.mxu0 0.0
        %931 = vmatpush1.msra.mxu0 0.0
        %932 = vmatprep.subr.mxu0 0.0
        %933 = vmatpush1.msra.mxu0 0.0
        %934 = vmatprep.subr.mxu0 0.0
        %935 = vmatpush1.msra.mxu0 0.0
        %936 = vmatprep.subr.mxu0 0.0
        %937 = vmatpush1.msra.mxu0 0.0
        %938 = vmatprep.subr.mxu0 0.0
        %939 = vmatpush1.msra.mxu0 0.0
        %940 = vmatprep.subr.mxu0 0.0
        %941 = vmatpush1.msra.mxu0 0.0
        %942 = vmatprep.subr.mxu0 0.0
        %943 = vmatpush1.msra.mxu0 0.0
        %944 = vmatprep.subr.mxu0 0.0
        %945 = vmatpush1.msra.mxu0 0.0
        %946 = vmatprep.subr.mxu0 0.0
        %947 = vmatpush1.msra.mxu0 0.0
        %948 = vmatprep.subr.mxu0 0.0
        %949 = vmatpush1.msra.mxu0 0.0
        %950 = vmatprep.subr.mxu0 0.0
        %951 = vmatpush1.msra.mxu0 0.0
        %952 = vmatprep.subr.mxu0 0.0
        %953 = vmatpush1.msra.mxu0 0.0
        %954 = vmatprep.subr.mxu0 0.0
        %955 = vmatpush1.msra.mxu0 0.0
        %956 = vmatprep.subr.mxu0 0.0
        %957 = vmatpush1.msra.mxu0 0.0
        %958 = vmatprep.subr.mxu0 0.0
        %959 = vmatpush1.msra.mxu0 0.0
        %960 = vmatprep.subr.mxu0 0.0
        %961 = vmatpush1.msra.mxu0 0.0
        %962 = vmatprep.subr.mxu0 0.0
        %963 = vmatpush1.msra.mxu0 0.0
        %964 = vmatprep.subr.mxu0 0.0
        %965 = vmatpush1.msra.mxu0 0.0
        %966 = vmatprep.subr.mxu0 0.0
        %967 = vmatpush1.msra.mxu0 0.0
        %968 = vmatprep.subr.mxu0 0.0
        %969 = vmatpush1.msra.mxu0 0.0
        %970 = vmatprep.subr.mxu0 0.0
        %971 = vmatpush1.msra.mxu0 0.0
        %972 = vmatprep.subr.mxu0 0.0
        %973 = vmatpush1.msra.mxu0 0.0
        %974 = vmatprep.subr.mxu0 0.0
        %975 = vmatpush1.msra.mxu0 0.0
        %976 = vmatprep.subr.mxu0 0.0
        %977 = vmatpush1.msra.mxu0 0.0
        %978 = vmatprep.subr.mxu0 0.0
        %979 = vmatpush1.msra.mxu0 0.0
        %980 = vmatprep.subr.mxu0 0.0
        %981 = vmatpush1.msra.mxu0 0.0
        %982 = vmatprep.subr.mxu0 0.0
        %983 = vmatpush1.msra.mxu0 0.0
        %984 = vmatprep.subr.mxu0 0.0
        %985 = vmatpush1.msra.mxu0 0.0
        %986 = vmatprep.subr.mxu0 0.0
        %987 = vmatpush1.msra.mxu0 0.0
        %988 = vmatprep.subr.mxu0 0.0
        %989 = vmatpush1.msra.mxu0 0.0
        %990 = vmatprep.mubr.f32.mxu0 0.0
        %991 = vmatmul.mubr.f32.gmra.mrb[0].mxu0 %v924
        %v992 = vpop.f32.mrb[0].mxu0
        %v993 = vadd.f32 0.0, %v992
        %v994 = vpop.f32.mrb[0].mxu0
        %995 = vdwg.mxu0
        %v996 = vrcp.pop %v918
        %v997 = vmul.f32 %v993, %v996
        %998 = vrot.lane.b32.xlu0 %v670, 112
        %v999 = vpop.permute.xlu0 %998
        %1000 = vrot.lane.b32.xlu0 %v586, 112
        %v1001 = vpop.permute.xlu0 %1000
        %v1002 = vsel %vm671, %v999, 0
        %v1004 = vsel %vm671, %v1001, 0
        %1006 = vmatprep.subr.mxu0 0.0
        %1007 = vmatpush1.xpose.msra.mxu0 %v1004
        %1008 = vmatprep.subr.mxu0 0.0
        %1009 = vmatpush1.xpose.msra.mxu0 0.0
        %1010 = vmatprep.subr.mxu0 0.0
        %1011 = vmatpush1.xpose.msra.mxu0 0.0
        %1012 = vmatprep.subr.mxu0 0.0
        %1013 = vmatpush1.xpose.msra.mxu0 0.0
        %1014 = vmatprep.subr.mxu0 0.0
        %1015 = vmatpush1.xpose.msra.mxu0 0.0
        %1016 = vmatprep.subr.mxu0 0.0
        %1017 = vmatpush1.xpose.msra.mxu0 0.0
        %1018 = vmatprep.subr.mxu0 0.0
        %1019 = vmatpush1.xpose.msra.mxu0 0.0
        %1020 = vmatprep.subr.mxu0 0.0
        %1021 = vmatpush1.xpose.msra.mxu0 0.0
        %1022 = vmatprep.subr.mxu0 0.0
        %1023 = vmatpush1.xpose.msra.mxu0 0.0
        %1024 = vmatprep.subr.mxu0 0.0
        %1025 = vmatpush1.xpose.msra.mxu0 0.0
        %1026 = vmatprep.subr.mxu0 0.0
        %1027 = vmatpush1.xpose.msra.mxu0 0.0
        %1028 = vmatprep.subr.mxu0 0.0
        %1029 = vmatpush1.xpose.msra.mxu0 0.0
        %1030 = vmatprep.subr.mxu0 0.0
        %1031 = vmatpush1.xpose.msra.mxu0 0.0
        %1032 = vmatprep.subr.mxu0 0.0
        %1033 = vmatpush1.xpose.msra.mxu0 0.0
        %1034 = vmatprep.subr.mxu0 0.0
        %1035 = vmatpush1.xpose.msra.mxu0 0.0
        %1036 = vmatprep.subr.mxu0 0.0
        %1037 = vmatpush1.xpose.msra.mxu0 0.0
        %1038 = vmatprep.subr.mxu0 0.0
        %1039 = vmatpush1.xpose.msra.mxu0 0.0
        %1040 = vmatprep.subr.mxu0 0.0
        %1041 = vmatpush1.xpose.msra.mxu0 0.0
        %1042 = vmatprep.subr.mxu0 0.0
        %1043 = vmatpush1.xpose.msra.mxu0 0.0
        %1044 = vmatprep.subr.mxu0 0.0
        %1045 = vmatpush1.xpose.msra.mxu0 0.0
        %1046 = vmatprep.subr.mxu0 0.0
        %1047 = vmatpush1.xpose.msra.mxu0 0.0
        %1048 = vmatprep.subr.mxu0 0.0
        %1049 = vmatpush1.xpose.msra.mxu0 0.0
        %1050 = vmatprep.subr.mxu0 0.0
        %1051 = vmatpush1.xpose.msra.mxu0 0.0
        %1052 = vmatprep.subr.mxu0 0.0
        %1053 = vmatpush1.xpose.msra.mxu0 0.0
        %1054 = vmatprep.subr.mxu0 0.0
        %1055 = vmatpush1.xpose.msra.mxu0 0.0
        %1056 = vmatprep.subr.mxu0 0.0
        %1057 = vmatpush1.xpose.msra.mxu0 0.0
        %1058 = vmatprep.subr.mxu0 0.0
        %1059 = vmatpush1.xpose.msra.mxu0 0.0
        %1060 = vmatprep.subr.mxu0 0.0
        %1061 = vmatpush1.xpose.msra.mxu0 0.0
        %1062 = vmatprep.subr.mxu0 0.0
        %1063 = vmatpush1.xpose.msra.mxu0 0.0
        %1064 = vmatprep.subr.mxu0 0.0
        %1065 = vmatpush1.xpose.msra.mxu0 0.0
        %1066 = vmatprep.subr.mxu0 0.0
        %1067 = vmatpush1.xpose.msra.mxu0 0.0
        %1068 = vmatprep.subr.mxu0 0.0
        %1069 = vmatpush1.xpose.msra.mxu0 0.0
        %1070 = vmatprep.mubr.f32.mxu0 0.0
        %1071 = vmatmul.mubr.f32.gmra.mrb[0].mxu0 %v1002
        %v1072 = vpop.f32.mrb[0].mxu0
        %v1073 = vadd.f32 0.0, %v1072
        %v1074 = vpop.f32.mrb[0].mxu0
        %1075 = vdwg.mxu0
        %v1076 = vsel %vm671, %v1073, -inf
        %1077 = vmax.xlane.f32.xlu0 %v1076
        %v1078 = vpop.xlane.xlu0 %1077
        %v1079 = vsub.f32 %v1073, %v1078
        %v1080 = vmul.f32 %v1079, 1.442695
        %v1081 = vpow.pop %v1080
        %v1082 = vsel %vm671, %v1081, 0.0
        %1083 = vadd.xlane.f32.xlu0 %v1082
        %v1084 = vpop.xlane.xlu0 %1083
        %1085 = vrot.lane.b32.xlu0 %v667, 112
        %v1086 = vpop.permute.xlu0 %1085
        %v1089 = vsel %vm671, %v1081, 0
        %1091 = vmatprep.subr.mxu0 0.0
        %1092 = vmatpush1.msra.mxu0 %v1086
        %1093 = vmatprep.subr.mxu0 0.0
        %1094 = vmatpush1.msra.mxu0 0.0
        %1095 = vmatprep.subr.mxu0 0.0
        %1096 = vmatpush1.msra.mxu0 0.0
        %1097 = vmatprep.subr.mxu0 0.0
        %1098 = vmatpush1.msra.mxu0 0.0
        %1099 = vmatprep.subr.mxu0 0.0
        %1100 = vmatpush1.msra.mxu0 0.0
        %1101 = vmatprep.subr.mxu0 0.0
        %1102 = vmatpush1.msra.mxu0 0.0
        %1103 = vmatprep.subr.mxu0 0.0
        %1104 = vmatpush1.msra.mxu0 0.0
        %1105 = vmatprep.subr.mxu0 0.0
        %1106 = vmatpush1.msra.mxu0 0.0
        %1107 = vmatprep.subr.mxu0 0.0
        %1108 = vmatpush1.msra.mxu0 0.0
        %1109 = vmatprep.subr.mxu0 0.0
        %1110 = vmatpush1.msra.mxu0 0.0
        %1111 = vmatprep.subr.mxu0 0.0
        %1112 = vmatpush1.msra.mxu0 0.0
        %1113 = vmatprep.subr.mxu0 0.0
        %1114 = vmatpush1.msra.mxu0 0.0
        %1115 = vmatprep.subr.mxu0 0.0
        %1116 = vmatpush1.msra.mxu0 0.0
        %1117 = vmatprep.subr.mxu0 0.0
        %1118 = vmatpush1.msra.mxu0 0.0
        %1119 = vmatprep.subr.mxu0 0.0
        %1120 = vmatpush1.msra.mxu0 0.0
        %1121 = vmatprep.subr.mxu0 0.0
        %1122 = vmatpush1.msra.mxu0 0.0
        %1123 = vmatprep.subr.mxu0 0.0
        %1124 = vmatpush1.msra.mxu0 0.0
        %1125 = vmatprep.subr.mxu0 0.0
        %1126 = vmatpush1.msra.mxu0 0.0
        %1127 = vmatprep.subr.mxu0 0.0
        %1128 = vmatpush1.msra.mxu0 0.0
        %1129 = vmatprep.subr.mxu0 0.0
        %1130 = vmatpush1.msra.mxu0 0.0
        %1131 = vmatprep.subr.mxu0 0.0
        %1132 = vmatpush1.msra.mxu0 0.0
        %1133 = vmatprep.subr.mxu0 0.0
        %1134 = vmatpush1.msra.mxu0 0.0
        %1135 = vmatprep.subr.mxu0 0.0
        %1136 = vmatpush1.msra.mxu0 0.0
        %1137 = vmatprep.subr.mxu0 0.0
        %1138 = vmatpush1.msra.mxu0 0.0
        %1139 = vmatprep.subr.mxu0 0.0
        %1140 = vmatpush1.msra.mxu0 0.0
        %1141 = vmatprep.subr.mxu0 0.0
        %1142 = vmatpush1.msra.mxu0 0.0
        %1143 = vmatprep.subr.mxu0 0.0
        %1144 = vmatpush1.msra.mxu0 0.0
        %1145 = vmatprep.subr.mxu0 0.0
        %1146 = vmatpush1.msra.mxu0 0.0
        %1147 = vmatprep.subr.mxu0 0.0
        %1148 = vmatpush1.msra.mxu0 0.0
        %1149 = vmatprep.subr.mxu0 0.0
        %1150 = vmatpush1.msra.mxu0 0.0
        %1151 = vmatprep.subr.mxu0 0.0
        %1152 = vmatpush1.msra.mxu0 0.0
        %1153 = vmatprep.subr.mxu0 0.0
        %1154 = vmatpush1.msra.mxu0 0.0
        %1155 = vmatprep.mubr.f32.mxu0 0.0
        %1156 = vmatmul.mubr.f32.gmra.mrb[0].mxu0 %v1089
        %v1157 = vpop.f32.mrb[0].mxu0
        %v1158 = vadd.f32 0.0, %v1157
        %v1159 = vpop.f32.mrb[0].mxu0
        %1160 = vdwg.mxu0
        %v1161 = vrcp.pop %v1084
        %v1162 = vmul.f32 %v1158, %v1161
        %1163 = vrot.lane.b32.xlu0 %v670, 104
        %v1164 = vpop.permute.xlu0 %1163
        %1165 = vrot.lane.b32.xlu0 %v586, 104
        %v1166 = vpop.permute.xlu0 %1165
        %v1167 = vsel %vm671, %v1164, 0
        %v1169 = vsel %vm671, %v1166, 0
        %1171 = vmatprep.subr.mxu0 0.0
        %1172 = vmatpush1.xpose.msra.mxu0 %v1169
        %1173 = vmatprep.subr.mxu0 0.0
        %1174 = vmatpush1.xpose.msra.mxu0 0.0
        %1175 = vmatprep.subr.mxu0 0.0
        %1176 = vmatpush1.xpose.msra.mxu0 0.0
        %1177 = vmatprep.subr.mxu0 0.0
        %1178 = vmatpush1.xpose.msra.mxu0 0.0
        %1179 = vmatprep.subr.mxu0 0.0
        %1180 = vmatpush1.xpose.msra.mxu0 0.0
        %1181 = vmatprep.subr.mxu0 0.0
        %1182 = vmatpush1.xpose.msra.mxu0 0.0
        %1183 = vmatprep.subr.mxu0 0.0
        %1184 = vmatpush1.xpose.msra.mxu0 0.0
        %1185 = vmatprep.subr.mxu0 0.0
        %1186 = vmatpush1.xpose.msra.mxu0 0.0
        %1187 = vmatprep.subr.mxu0 0.0
        %1188 = vmatpush1.xpose.msra.mxu0 0.0
        %1189 = vmatprep.subr.mxu0 0.0
        %1190 = vmatpush1.xpose.msra.mxu0 0.0
        %1191 = vmatprep.subr.mxu0 0.0
        %1192 = vmatpush1.xpose.msra.mxu0 0.0
        %1193 = vmatprep.subr.mxu0 0.0
        %1194 = vmatpush1.xpose.msra.mxu0 0.0
        %1195 = vmatprep.subr.mxu0 0.0
        %1196 = vmatpush1.xpose.msra.mxu0 0.0
        %1197 = vmatprep.subr.mxu0 0.0
        %1198 = vmatpush1.xpose.msra.mxu0 0.0
        %1199 = vmatprep.subr.mxu0 0.0
        %1200 = vmatpush1.xpose.msra.mxu0 0.0
        %1201 = vmatprep.subr.mxu0 0.0
        %1202 = vmatpush1.xpose.msra.mxu0 0.0
        %1203 = vmatprep.subr.mxu0 0.0
        %1204 = vmatpush1.xpose.msra.mxu0 0.0
        %1205 = vmatprep.subr.mxu0 0.0
        %1206 = vmatpush1.xpose.msra.mxu0 0.0
        %1207 = vmatprep.subr.mxu0 0.0
        %1208 = vmatpush1.xpose.msra.mxu0 0.0
        %1209 = vmatprep.subr.mxu0 0.0
        %1210 = vmatpush1.xpose.msra.mxu0 0.0
        %1211 = vmatprep.subr.mxu0 0.0
        %1212 = vmatpush1.xpose.msra.mxu0 0.0
        %1213 = vmatprep.subr.mxu0 0.0
        %1214 = vmatpush1.xpose.msra.mxu0 0.0
        %1215 = vmatprep.subr.mxu0 0.0
        %1216 = vmatpush1.xpose.msra.mxu0 0.0
        %1217 = vmatprep.subr.mxu0 0.0
        %1218 = vmatpush1.xpose.msra.mxu0 0.0
        %1219 = vmatprep.subr.mxu0 0.0
        %1220 = vmatpush1.xpose.msra.mxu0 0.0
        %1221 = vmatprep.subr.mxu0 0.0
        %1222 = vmatpush1.xpose.msra.mxu0 0.0
        %1223 = vmatprep.subr.mxu0 0.0
        %1224 = vmatpush1.xpose.msra.mxu0 0.0
        %1225 = vmatprep.subr.mxu0 0.0
        %1226 = vmatpush1.xpose.msra.mxu0 0.0
        %1227 = vmatprep.subr.mxu0 0.0
        %1228 = vmatpush1.xpose.msra.mxu0 0.0
        %1229 = vmatprep.subr.mxu0 0.0
        %1230 = vmatpush1.xpose.msra.mxu0 0.0
        %1231 = vmatprep.subr.mxu0 0.0
        %1232 = vmatpush1.xpose.msra.mxu0 0.0
        %1233 = vmatprep.subr.mxu0 0.0
        %1234 = vmatpush1.xpose.msra.mxu0 0.0
        %1235 = vmatprep.mubr.f32.mxu0 0.0
        %1236 = vmatmul.mubr.f32.gmra.mrb[0].mxu0 %v1167
        %v1237 = vpop.f32.mrb[0].mxu0
        %v1238 = vadd.f32 0.0, %v1237
        %v1239 = vpop.f32.mrb[0].mxu0
        %1240 = vdwg.mxu0
        %v1241 = vsel %vm671, %v1238, -inf
        %1242 = vmax.xlane.f32.xlu0 %v1241
        %v1243 = vpop.xlane.xlu0 %1242
        %v1244 = vsub.f32 %v1238, %v1243
        %v1245 = vmul.f32 %v1244, 1.442695
        %v1246 = vpow.pop %v1245
        %v1247 = vsel %vm671, %v1246, 0.0
        %1248 = vadd.xlane.f32.xlu0 %v1247
        %v1249 = vpop.xlane.xlu0 %1248
        %1250 = vrot.lane.b32.xlu0 %v667, 104
        %v1251 = vpop.permute.xlu0 %1250
        %v1254 = vsel %vm671, %v1246, 0
        %1256 = vmatprep.subr.mxu0 0.0
        %1257 = vmatpush1.msra.mxu0 %v1251
        %1258 = vmatprep.subr.mxu0 0.0
        %1259 = vmatpush1.msra.mxu0 0.0
        %1260 = vmatprep.subr.mxu0 0.0
        %1261 = vmatpush1.msra.mxu0 0.0
        %1262 = vmatprep.subr.mxu0 0.0
        %1263 = vmatpush1.msra.mxu0 0.0
        %1264 = vmatprep.subr.mxu0 0.0
        %1265 = vmatpush1.msra.mxu0 0.0
        %1266 = vmatprep.subr.mxu0 0.0
        %1267 = vmatpush1.msra.mxu0 0.0
        %1268 = vmatprep.subr.mxu0 0.0
        %1269 = vmatpush1.msra.mxu0 0.0
        %1270 = vmatprep.subr.mxu0 0.0
        %1271 = vmatpush1.msra.mxu0 0.0
        %1272 = vmatprep.subr.mxu0 0.0
        %1273 = vmatpush1.msra.mxu0 0.0
        %1274 = vmatprep.subr.mxu0 0.0
        %1275 = vmatpush1.msra.mxu0 0.0
        %1276 = vmatprep.subr.mxu0 0.0
        %1277 = vmatpush1.msra.mxu0 0.0
        %1278 = vmatprep.subr.mxu0 0.0
        %1279 = vmatpush1.msra.mxu0 0.0
        %1280 = vmatprep.subr.mxu0 0.0
        %1281 = vmatpush1.msra.mxu0 0.0
        %1282 = vmatprep.subr.mxu0 0.0
        %1283 = vmatpush1.msra.mxu0 0.0
        %1284 = vmatprep.subr.mxu0 0.0
        %1285 = vmatpush1.msra.mxu0 0.0
        %1286 = vmatprep.subr.mxu0 0.0
        %1287 = vmatpush1.msra.mxu0 0.0
        %1288 = vmatprep.subr.mxu0 0.0
        %1289 = vmatpush1.msra.mxu0 0.0
        %1290 = vmatprep.subr.mxu0 0.0
        %1291 = vmatpush1.msra.mxu0 0.0
        %1292 = vmatprep.subr.mxu0 0.0
        %1293 = vmatpush1.msra.mxu0 0.0
        %1294 = vmatprep.subr.mxu0 0.0
        %1295 = vmatpush1.msra.mxu0 0.0
        %1296 = vmatprep.subr.mxu0 0.0
        %1297 = vmatpush1.msra.mxu0 0.0
        %1298 = vmatprep.subr.mxu0 0.0
        %1299 = vmatpush1.msra.mxu0 0.0
        %1300 = vmatprep.subr.mxu0 0.0
        %1301 = vmatpush1.msra.mxu0 0.0
        %1302 = vmatprep.subr.mxu0 0.0
        %1303 = vmatpush1.msra.mxu0 0.0
        %1304 = vmatprep.subr.mxu0 0.0
        %1305 = vmatpush1.msra.mxu0 0.0
        %1306 = vmatprep.subr.mxu0 0.0
        %1307 = vmatpush1.msra.mxu0 0.0
        %1308 = vmatprep.subr.mxu0 0.0
        %1309 = vmatpush1.msra.mxu0 0.0
        %1310 = vmatprep.subr.mxu0 0.0
        %1311 = vmatpush1.msra.mxu0 0.0
        %1312 = vmatprep.subr.mxu0 0.0
        %1313 = vmatpush1.msra.mxu0 0.0
        %1314 = vmatprep.subr.mxu0 0.0
        %1315 = vmatpush1.msra.mxu0 0.0
        %1316 = vmatprep.subr.mxu0 0.0
        %1317 = vmatpush1.msra.mxu0 0.0
        %1318 = vmatprep.subr.mxu0 0.0
        %1319 = vmatpush1.msra.mxu0 0.0
        %1320 = vmatprep.mubr.f32.mxu0 0.0
        %1321 = vmatmul.mubr.f32.gmra.mrb[0].mxu0 %v1254
        %v1322 = vpop.f32.mrb[0].mxu0
        %v1323 = vadd.f32 0.0, %v1322
        %v1324 = vpop.f32.mrb[0].mxu0
        %1325 = vdwg.mxu0
        %v1326 = vrcp.pop %v1249
        %v1327 = vmul.f32 %v1323, %v1326
        %1329 = vrot.lane.b32.xlu0 %v997, 8
        %v1330 = vpop.permute.xlu0 %1329
        %1333 = vrot.lane.b32.xlu0 %v1162, 16
        %v1334 = vpop.permute.xlu0 %1333
        %1337 = vrot.lane.b32.xlu0 %v1327, 24
        %v1338 = vpop.permute.xlu0 %1337
        %v1340 = vsel %vm671, %v831, %v1330
        %vm1341 = vcmask 130048
        %v1342 = vsel %vm1341, %v1340, %v1334
        %vm1343 = vcmask 195584
        %v1344 = vsel %vm1343, %v1342, %v1338
        %1345 = vst.msk [vmem:[%s391] sm:$0xff] %vm393, %v1344
        %s1346 = sand.u32 %s230, 1
        %s1347 = scalar_lea.sflag [#allocation4], %s1346
        %s1348 = sand.u32 %s230, 1
        %s1349 = smul.addr %s1348, 8
        %s1350 = scalar_lea.vmem [#allocation10], %s1349
        // Predicated region
        $region73: #{tpu_custom_call.1} parent=55 // pred_check
          %p1351 = pneg %p240
        $region74: #{tpu_custom_call.1} parent=55 // pred_check_branch
          %1353 = sbr.rel (%p1351) target = $region76
        $region75: #{tpu_custom_call.1} parent=55 // pred_region
          %s1355 = ssub.s32 128, 128
          %1356 = vsyncadd %s1347, %s1355
          %s1357 = smul.addr %s28, 128
          %s1358 = scalar_lea.hbm %s9, %s1357
          %s1360 = sshll.u32 %s1350, 4
          %s1361 = int_to_ptr.vmem [resolvable:$true] %s1360
          %1363 = dma.vmem_to_hbm [thread:$0]  %s1361, 128, %s1358, %s1347
        $region76: #{tpu_custom_call.1} parent=55 // pred_fallthru
          _
      $region56: #{tpu_custom_call.1} parent=5 // pred_fallthru
        _
      %p1364 = scmp.le.s32.totalorder 2, %s23
      // Predicated region
      $region77: #{tpu_custom_call.1} parent=5 // pred_check
        %p1365 = pneg %p1364
      $region78: #{tpu_custom_call.1} parent=5 // pred_check_branch
        %1367 = sbr.rel (%p1365) target = $region80
      $region79: #{tpu_custom_call.1} parent=5 // pred_region
        %s1368 = ssub.s32 %s23, 2
        // Predicated region
        $region81: #{tpu_custom_call.1} parent=79 // pred_check
          %p1369 = pneg %p246
        $region82: #{tpu_custom_call.1} parent=79 // pred_check_branch
          %1371 = sbr.rel (%p1369) target = $region84
        $region83: #{tpu_custom_call.1} parent=79 // pred_region
          %s1372 = sand.u32 %s231, 1
          %s1373 = scalar_lea.sflag [#allocation4], %s1372
          %s1374 = sand.u32 %s231, 1
          %s1375 = smul.addr %s1374, 8
          %s1376 = scalar_lea.vmem [#allocation10], %s1375
          %1377 = dma.done %s1373, 128
        $region84: #{tpu_custom_call.1} parent=79 // pred_fallthru
          _
      $region80: #{tpu_custom_call.1} parent=5 // pred_fallthru
        _
    $region6: #{tpu_custom_call.1} parent=1 // loop_footer
      %s27 = sadd.s32 1, %s23
    $region7: #{tpu_custom_call.1} parent=1 // loop_footer_branch
      %22 = sbr.rel target = $region3
    $region8: #{tpu_custom_call.1} parent=1 // loop_exit
      _
    %1378 = vsyncpa [#allocation3], 1
    %s1379 = scalar_lea.sflag [#allocation3], 1
    %1380 = vsyncpa %s1379, 1
    %1381 = vsyncpa [#allocation6], 1
    %1382 = vsyncpa [#allocation9], 1
    %1383 = vsyncpa [#allocation4], 1
    %s1384 = scalar_lea.sflag [#allocation4], 1
    %1385 = vsyncpa %s1384, 1

</llo_original>
